<compile_context>
chip_gen: v5e
topology: v5e:2x2
jax: 0.10.0
libtpu: 0.0.40
codegen_flags: <defaults>
</compile_context>

<pallas_src>
import jax
import jax.numpy as jnp
import numpy as np
from jax.experimental import pallas as pl
from jax.experimental.pallas import tpu as pltpu

SELU_ALPHA = 1.6732632423543772
SELU_SCALE = 1.0507009873554804
BN_EPS = 1e-5


def _round_up(x, m):
    return ((x + m - 1) // m) * m


def fused_ll_bn_selu_kernel(x_ref, w_ref, b_ref, o_ref):
    """x_ref: (tm, K) bf16 rows of flattened SSL features
    w_ref: (K, Np) bf16 BN-folded Linear weight (K-major for the MXU)
    b_ref: (1, Np) f32 BN-folded Linear bias
    o_ref: (tm, Np) f32 output tile (lane-dense, Np multiple of 128)
    """
    # Linear (+ folded BatchNorm): bf16 MXU matmul with f32 accumulation.
    y = jnp.dot(x_ref[...], w_ref[...], preferred_element_type=jnp.float32)
    y = y + b_ref[...]

    # SELU epilogue in f32.
    y = SELU_SCALE * jnp.where(y > 0, y, SELU_ALPHA * (jnp.exp(y) - 1.0))

    o_ref[...] = y.astype(o_ref.dtype)


def fused_forward(x_feat, w_kn, bias, bn_params, *, tm_max=1024):
    """x_feat: [B, T, K] f32, w_kn: [K, N] f32, bias: [N] f32,
    bn_params: [gamma, beta, running_mean, running_var] f32."""
    B, T, K = x_feat.shape
    N = w_kn.shape[1]
    M = B * T

    # --- Fold eval-mode BatchNorm2d(1) (scalar affine) into the Linear params.
    gamma, beta, mean, var = bn_params[0], bn_params[1], bn_params[2], bn_params[3]
    inv = gamma * jax.lax.rsqrt(var + BN_EPS)
    w_fold = w_kn.astype(jnp.float32) * inv
    b_fold = (bias.astype(jnp.float32) - mean) * inv + beta

    # --- Lane-dense output: pad N up to a multiple of 128 (zero columns).
    n_pad = _round_up(N, 128)
    if n_pad != N:
        w_fold = jnp.pad(w_fold, ((0, 0), (0, n_pad - N)))
        b_fold = jnp.pad(b_fold, (0, n_pad - N))
    w_bf = w_fold.astype(jnp.bfloat16)              # resident in VMEM
    b2d = b_fold.reshape(1, n_pad)

    # --- Row tile: large (amortizes ~0.35us/step overhead, big DMAs), multiple
    # of 256 (MXU-friendly on all generations), capped so the bf16 x tile stays
    # comfortably inside VMEM even on v7x (tm=1024: 2 * 1024*1024*2B = 4 MiB
    # double-buffered).  Pad M up to a multiple of tm; extra rows are sliced off.
    tm = min(tm_max, max(256, _round_up(M, 256)))
    m_pad = _round_up(M, tm)

    xf = x_feat.reshape(M, K).astype(jnp.bfloat16)
    if m_pad != M:
        xf = jnp.pad(xf, ((0, m_pad - M), (0, 0)))

    out = pl.pallas_call(
        fused_ll_bn_selu_kernel,
        out_shape=jax.ShapeDtypeStruct((m_pad, n_pad), jnp.float32),
        grid_spec=pl.GridSpec(
            grid=(m_pad // tm,),
            in_specs=[
                pl.BlockSpec((tm, K), lambda i: (i, 0)),      # x rows (streamed)
                pl.BlockSpec((K, n_pad), lambda i: (0, 0)),   # weight (resident)
                pl.BlockSpec((1, n_pad), lambda i: (0, 0)),   # bias (resident)
            ],
            out_specs=pl.BlockSpec((tm, n_pad), lambda i: (i, 0)),
        ),
        compiler_params=pltpu.CompilerParams(
            dimension_semantics=("parallel",),                # megacore on v7x
        ),
    )(xf, w_bf, b2d)

    return out[:M, :N].reshape(B, T, N)


def reference_forward(x_feat, w_kn, bias, bn_params):
    y = jnp.einsum("btk,kn->btn", x_feat, w_kn) + bias
    gamma, beta, mean, var = bn_params
    y = (y - mean) * (gamma / jnp.sqrt(var + BN_EPS)) + beta
    return SELU_SCALE * jnp.where(y > 0, y, SELU_ALPHA * (jnp.exp(y) - 1.0))


if __name__ == "__main__":
    # Small shapes consistent with the module: SSL feature dim is fixed at 1024,
    # args.emb_size -> 32, batch=2, seq(time)=8.
    B, T, K, N = 2, 8, 1024, 32

    key = jax.random.PRNGKey(0)
    k_x, k_w, k_b = jax.random.split(key, 3)

    x_ssl_feat = jax.random.normal(k_x, (B, T, K), dtype=jnp.float32)

    # nn.Linear(1024, emb_size): weight [N, K], stored transposed as [K, N].
    w = jax.random.normal(k_w, (N, K), dtype=jnp.float32) * (1.0 / np.sqrt(K))
    w_kn = w.T
    bias = jax.random.normal(k_b, (N,), dtype=jnp.float32) * 0.01

    # BatchNorm2d(1) params: [gamma, beta, running_mean, running_var]
    # (deterministic, non-trivial so the affine path is exercised; eval mode).
    bn_params = jnp.array([1.1, 0.05, 0.01, 0.9], dtype=jnp.float32)

    out = fused_forward(x_ssl_feat, w_kn, bias, bn_params)
    out = jax.block_until_ready(out)

    # bf16 matmul inputs (f32 accumulation) -> loosened tolerance vs f32 ref.
    ref = reference_forward(x_ssl_feat, w_kn, bias, bn_params)
    np.testing.assert_allclose(np.asarray(out), np.asarray(ref),
                               rtol=2e-2, atol=2e-2)

    assert out.shape == (B, T, N)
    print("KERNEL_OK")
</pallas_src>

<mosaic_0001>
module attributes {stable_mosaic.version = 11 : i64} {
  func.func @fused_ll_bn_selu_kernel(%arg0: i32, %arg1: memref<256x1024xbf16, #tpu.memory_space<vmem>>, %arg2: memref<1024x128xbf16, #tpu.memory_space<vmem>>, %arg3: memref<1x128xf32, #tpu.memory_space<vmem>>, %arg4: memref<256x128xf32, #tpu.memory_space<vmem>>) attributes {dimension_semantics = [#tpu.dimension_semantics<parallel>], iteration_bounds = array<i64: 1>, scalar_prefetch = 0 : i64, scratch_operands = 0 : i64, tpu.core_type = #tpu.core_type<tc>, window_params = [{transform_indices = @transform_0, window_bounds = array<i64: 256, 1024>}, {pipeline_mode = #tpu.pipeline_mode<synchronous>, transform_indices = @transform_1, window_bounds = array<i64: 1024, 128>}, {pipeline_mode = #tpu.pipeline_mode<synchronous>, transform_indices = @transform_2, window_bounds = array<i64: 1, 128>}, {transform_indices = @transform_3, window_bounds = array<i64: 256, 128>}]} {
    %c0 = arith.constant 0 : index
    %c0_0 = arith.constant 0 : index
    %0 = vector.load %arg1[%c0, %c0_0] : memref<256x1024xbf16, #tpu.memory_space<vmem>>, vector<256x1024xbf16>
    %c0_1 = arith.constant 0 : index
    %c0_2 = arith.constant 0 : index
    %1 = vector.load %arg2[%c0_1, %c0_2] : memref<1024x128xbf16, #tpu.memory_space<vmem>>, vector<1024x128xbf16>
    %cst = arith.constant dense<0.000000e+00> : vector<256x128xf32>
    %2 = tpu.matmul %0, %1, %cst {dimension_numbers = #tpu.dot_dimension_numbers<[1], [0], [0], [1], [0, 0, 1, 1], [], []>} : vector<256x1024xbf16>, vector<1024x128xbf16>, vector<256x128xf32> -> vector<256x128xf32>
    %c0_3 = arith.constant 0 : index
    %c0_4 = arith.constant 0 : index
    %3 = vector.load %arg3[%c0_3, %c0_4] : memref<1x128xf32, #tpu.memory_space<vmem>>, vector<1x128xf32>
    %4 = vector.broadcast %3 : vector<1x128xf32> to vector<256x128xf32>
    %5 = arith.addf %2, %4 : vector<256x128xf32>
    %cst_5 = arith.constant 0.000000e+00 : f32
    %6 = vector.broadcast %cst_5 : f32 to vector<256x128xf32>
    %7 = arith.cmpf ogt, %5, %6 : vector<256x128xf32>
    %8 = math.exp %5 : vector<256x128xf32>
    %cst_6 = arith.constant 1.000000e+00 : f32
    %9 = vector.broadcast %cst_6 : f32 to vector<256x128xf32>
    %10 = arith.subf %8, %9 : vector<256x128xf32>
    %cst_7 = arith.constant 1.67326319 : f32
    %11 = vector.broadcast %cst_7 : f32 to vector<256x128xf32>
    %12 = arith.mulf %11, %10 : vector<256x128xf32>
    %13 = arith.select %7, %5, %12 : vector<256x128xi1>, vector<256x128xf32>
    %cst_8 = arith.constant 1.05070102 : f32
    %14 = vector.broadcast %cst_8 : f32 to vector<256x128xf32>
    %15 = arith.mulf %14, %13 : vector<256x128xf32>
    %c0_9 = arith.constant 0 : index
    %c0_10 = arith.constant 0 : index
    %16 = vector.load %arg4[%c0_9, %c0_10] : memref<256x128xf32, #tpu.memory_space<vmem>>, vector<256x128xf32>
    tpu.vector_store %arg4[%c0_9, %c0_10], %15 {strides = array<i32>} : memref<256x128xf32, #tpu.memory_space<vmem>>, vector<256x128xf32>,
    return
  }
  func.func @transform_0(%arg0: i32) -> (i32, i32) {
    %c0_i32 = arith.constant 0 : i32
    %c0_i32_0 = arith.constant 0 : i32
    return %arg0, %c0_i32 : i32, i32
  }
  func.func @transform_1(%arg0: i32) -> (i32, i32) {
    %c0_i32 = arith.constant 0 : i32
    %c0_i32_0 = arith.constant 0 : i32
    %c0_i32_1 = arith.constant 0 : i32
    return %c0_i32, %c0_i32_0 : i32, i32
  }
  func.func @transform_2(%arg0: i32) -> (i32, i32) {
    %c0_i32 = arith.constant 0 : i32
    %c0_i32_0 = arith.constant 0 : i32
    %c0_i32_1 = arith.constant 0 : i32
    return %c0_i32, %c0_i32_0 : i32, i32
  }
  func.func @transform_3(%arg0: i32) -> (i32, i32) {
    %c0_i32 = arith.constant 0 : i32
    %c0_i32_0 = arith.constant 0 : i32
    return %arg0, %c0_i32 : i32, i32
  }
}

</mosaic_0001>

<llo_original>
// kernel: tpu_custom_call.1
$region0: #{tpu_custom_call.1}
  #allocation0 [shape = 'u32[]', space=smem, size = 0x4, offset = 0x4, fixed_abs, tag = 'smem constant byte address 0x4 - core index']
  #allocation1 [shape = 'u32[72,128]{1,0:T(1,128)}', space=vmem, size = 0x9000, scoped, tag = 'internal scratch']
  %s0 = inlined_call_operand.hbm [shape: bf16[256,1024], index: 0, kind: input, shape index: {}]
  %s1 = inlined_call_operand.hbm [shape: bf16[1024,128], index: 1, kind: input, shape index: {}]
  %s2 = inlined_call_operand.vmem [shape: f32[1,128], index: 2, kind: input, shape index: {}]
  %s3 = inlined_call_operand.hbm [shape: f32[256,128], index: 3, kind: output, shape index: {}]
  %s4 = sld [smem:[#allocation0]]
  $region30: #{tpu_custom_call.1} parent=0
    _
  %s6 = ssub.s32 1, %s4
  %s7 = scalar_select 0, %s6, %s4
  $region1: #{tpu_custom_call.1} parent=0
    #allocation2 [shape = 'u8[524288]{0}', space=vmem, size = 0x80000, scoped, tag = 'input window, operand 0, single buffered']
    #allocation3 [shape = 's32[1]{0}', space=sflag, size = 0x4, scoped, tag = 'scoped memory for tpu_custom_call.1']
    #allocation4 [shape = 's32[1]{0}', space=sflag, size = 0x4, scoped, tag = 'scoped memory for tpu_custom_call.1']
    #allocation5 [shape = 'u8[262144]{0}', space=vmem, size = 0x40000, scoped, tag = 'input window, operand 1, single buffered']
    #allocation6 [shape = 's32[1]{0}', space=sflag, size = 0x4, scoped, tag = 'scoped memory for tpu_custom_call.1']
    #allocation7 [shape = 'u8[131072]{0}', space=vmem, size = 0x20000, scoped, tag = 'output window, operand 0, single buffered']
    %8 = vsyncpa [#allocation3], 0
    %9 = vsyncpa [#allocation6], 0
    %10 = vsyncpa [#allocation4], 0
    // Predicated region
    $region2: #{tpu_custom_call.1} parent=1 // pred_check
      _
    $region3: #{tpu_custom_call.1} parent=1 // pred_check_branch
      %12 = sbr.rel (0) target = $region5
    $region4: #{tpu_custom_call.1} parent=1 // pred_region
      %14 = vsyncadd [#allocation3], 0
      %s15 = sshll.u32 %s0, 4
      %s16 = int_to_ptr.hbm [resolvable:$true] %s15
      %s17 = sshll.u32 [#allocation2], 4
      %s18 = int_to_ptr.vmem [resolvable:$true] %s17
      %23 = dma.hbm_to_vmem [thread:$0]  %s16, 16384, %s18, [#allocation3], 512, 512, 32
    $region5: #{tpu_custom_call.1} parent=1 // pred_fallthru
      _
    // Predicated region
    $region6: #{tpu_custom_call.1} parent=1 // pred_check
      _
    $region7: #{tpu_custom_call.1} parent=1 // pred_check_branch
      %25 = sbr.rel (0) target = $region9
    $region8: #{tpu_custom_call.1} parent=1 // pred_region
      %27 = vsyncadd [#allocation6], 0
      %s28 = sshll.u32 %s1, 4
      %s29 = int_to_ptr.hbm [resolvable:$true] %s28
      %s30 = sshll.u32 [#allocation5], 4
      %s31 = int_to_ptr.vmem [resolvable:$true] %s30
      %36 = dma.hbm_to_vmem [thread:$0]  %s29, 8192, %s31, [#allocation6], 64, 64, 4
    $region9: #{tpu_custom_call.1} parent=1 // pred_fallthru
      _
    // Predicated region
    $region10: #{tpu_custom_call.1} parent=1 // pred_check
      _
    $region11: #{tpu_custom_call.1} parent=1 // pred_check_branch
      %38 = sbr.rel (0) target = $region13
    $region12: #{tpu_custom_call.1} parent=1 // pred_region
      _
    $region13: #{tpu_custom_call.1} parent=1 // pred_fallthru
      _
    // Predicated region
    $region14: #{tpu_custom_call.1} parent=1 // pred_check
      _
    $region15: #{tpu_custom_call.1} parent=1 // pred_check_branch
      %40 = sbr.rel (0) target = $region17
    $region16: #{tpu_custom_call.1} parent=1 // pred_region
      %42 = dma.done [#allocation3], 16384
    $region17: #{tpu_custom_call.1} parent=1 // pred_fallthru
      _
    // Predicated region
    $region18: #{tpu_custom_call.1} parent=1 // pred_check
      _
    $region19: #{tpu_custom_call.1} parent=1 // pred_check_branch
      %44 = sbr.rel (0) target = $region21
    $region20: #{tpu_custom_call.1} parent=1 // pred_region
      %46 = dma.done [#allocation6], 8192
    $region21: #{tpu_custom_call.1} parent=1 // pred_fallthru
      _
    %v47 = vld [vmem:[#allocation2] sm:$0xff]
    %v48 = vld [vmem:[#allocation2 + $0x8] sm:$0xff]
    %v49 = vld [vmem:[#allocation2 + $0x10] sm:$0xff]
    %v50 = vld [vmem:[#allocation2 + $0x18] sm:$0xff]
    %v51 = vld [vmem:[#allocation2 + $0x20] sm:$0xff]
    %v52 = vld [vmem:[#allocation2 + $0x28] sm:$0xff]
    %v53 = vld [vmem:[#allocation2 + $0x30] sm:$0xff]
    %v54 = vld [vmem:[#allocation2 + $0x38] sm:$0xff]
    %v55 = vld [vmem:[#allocation2 + $0x40] sm:$0xff]
    %v56 = vld [vmem:[#allocation2 + $0x48] sm:$0xff]
    %v57 = vld [vmem:[#allocation2 + $0x50] sm:$0xff]
    %v58 = vld [vmem:[#allocation2 + $0x58] sm:$0xff]
    %v59 = vld [vmem:[#allocation2 + $0x60] sm:$0xff]
    %v60 = vld [vmem:[#allocation2 + $0x68] sm:$0xff]
    %v61 = vld [vmem:[#allocation2 + $0x70] sm:$0xff]
    %v62 = vld [vmem:[#allocation2 + $0x78] sm:$0xff]
    %v63 = vld [vmem:[#allocation2 + $0x80] sm:$0xff]
    %v64 = vld [vmem:[#allocation2 + $0x88] sm:$0xff]
    %v65 = vld [vmem:[#allocation2 + $0x90] sm:$0xff]
    %v66 = vld [vmem:[#allocation2 + $0x98] sm:$0xff]
    %v67 = vld [vmem:[#allocation2 + $0xa0] sm:$0xff]
    %v68 = vld [vmem:[#allocation2 + $0xa8] sm:$0xff]
    %v69 = vld [vmem:[#allocation2 + $0xb0] sm:$0xff]
    %v70 = vld [vmem:[#allocation2 + $0xb8] sm:$0xff]
    %v71 = vld [vmem:[#allocation2 + $0xc0] sm:$0xff]
    %v72 = vld [vmem:[#allocation2 + $0xc8] sm:$0xff]
    %v73 = vld [vmem:[#allocation2 + $0xd0] sm:$0xff]
    %v74 = vld [vmem:[#allocation2 + $0xd8] sm:$0xff]
    %v75 = vld [vmem:[#allocation2 + $0xe0] sm:$0xff]
    %v76 = vld [vmem:[#allocation2 + $0xe8] sm:$0xff]
    %v77 = vld [vmem:[#allocation2 + $0xf0] sm:$0xff]
    %v78 = vld [vmem:[#allocation2 + $0xf8] sm:$0xff]
    %v79 = vld [vmem:[#allocation2 + $0x100] sm:$0xff]
    %v80 = vld [vmem:[#allocation2 + $0x108] sm:$0xff]
    %v81 = vld [vmem:[#allocation2 + $0x110] sm:$0xff]
    %v82 = vld [vmem:[#allocation2 + $0x118] sm:$0xff]
    %v83 = vld [vmem:[#allocation2 + $0x120] sm:$0xff]
    %v84 = vld [vmem:[#allocation2 + $0x128] sm:$0xff]
    %v85 = vld [vmem:[#allocation2 + $0x130] sm:$0xff]
    %v86 = vld [vmem:[#allocation2 + $0x138] sm:$0xff]
    %v87 = vld [vmem:[#allocation2 + $0x140] sm:$0xff]
    %v88 = vld [vmem:[#allocation2 + $0x148] sm:$0xff]
    %v89 = vld [vmem:[#allocation2 + $0x150] sm:$0xff]
    %v90 = vld [vmem:[#allocation2 + $0x158] sm:$0xff]
    %v91 = vld [vmem:[#allocation2 + $0x160] sm:$0xff]
    %v92 = vld [vmem:[#allocation2 + $0x168] sm:$0xff]
    %v93 = vld [vmem:[#allocation2 + $0x170] sm:$0xff]
    %v94 = vld [vmem:[#allocation2 + $0x178] sm:$0xff]
    %v95 = vld [vmem:[#allocation2 + $0x180] sm:$0xff]
    %v96 = vld [vmem:[#allocation2 + $0x188] sm:$0xff]
    %v97 = vld [vmem:[#allocation2 + $0x190] sm:$0xff]
    %v98 = vld [vmem:[#allocation2 + $0x198] sm:$0xff]
    %v99 = vld [vmem:[#allocation2 + $0x1a0] sm:$0xff]
    %v100 = vld [vmem:[#allocation2 + $0x1a8] sm:$0xff]
    %v101 = vld [vmem:[#allocation2 + $0x1b0] sm:$0xff]
    %v102 = vld [vmem:[#allocation2 + $0x1b8] sm:$0xff]
    %v103 = vld [vmem:[#allocation2 + $0x1c0] sm:$0xff]
    %v104 = vld [vmem:[#allocation2 + $0x1c8] sm:$0xff]
    %v105 = vld [vmem:[#allocation2 + $0x1d0] sm:$0xff]
    %v106 = vld [vmem:[#allocation2 + $0x1d8] sm:$0xff]
    %v107 = vld [vmem:[#allocation2 + $0x1e0] sm:$0xff]
    %v108 = vld [vmem:[#allocation2 + $0x1e8] sm:$0xff]
    %v109 = vld [vmem:[#allocation2 + $0x1f0] sm:$0xff]
    %v110 = vld [vmem:[#allocation2 + $0x1f8] sm:$0xff]
    %v111 = vld [vmem:[#allocation2 + $0x200] sm:$0xff]
    %v112 = vld [vmem:[#allocation2 + $0x208] sm:$0xff]
    %v113 = vld [vmem:[#allocation2 + $0x210] sm:$0xff]
    %v114 = vld [vmem:[#allocation2 + $0x218] sm:$0xff]
    %v115 = vld [vmem:[#allocation2 + $0x220] sm:$0xff]
    %v116 = vld [vmem:[#allocation2 + $0x228] sm:$0xff]
    %v117 = vld [vmem:[#allocation2 + $0x230] sm:$0xff]
    %v118 = vld [vmem:[#allocation2 + $0x238] sm:$0xff]
    %v119 = vld [vmem:[#allocation2 + $0x240] sm:$0xff]
    %v120 = vld [vmem:[#allocation2 + $0x248] sm:$0xff]
    %v121 = vld [vmem:[#allocation2 + $0x250] sm:$0xff]
    %v122 = vld [vmem:[#allocation2 + $0x258] sm:$0xff]
    %v123 = vld [vmem:[#allocation2 + $0x260] sm:$0xff]
    %v124 = vld [vmem:[#allocation2 + $0x268] sm:$0xff]
    %v125 = vld [vmem:[#allocation2 + $0x270] sm:$0xff]
    %v126 = vld [vmem:[#allocation2 + $0x278] sm:$0xff]
    %v127 = vld [vmem:[#allocation2 + $0x280] sm:$0xff]
    %v128 = vld [vmem:[#allocation2 + $0x288] sm:$0xff]
    %v129 = vld [vmem:[#allocation2 + $0x290] sm:$0xff]
    %v130 = vld [vmem:[#allocation2 + $0x298] sm:$0xff]
    %v131 = vld [vmem:[#allocation2 + $0x2a0] sm:$0xff]
    %v132 = vld [vmem:[#allocation2 + $0x2a8] sm:$0xff]
    %v133 = vld [vmem:[#allocation2 + $0x2b0] sm:$0xff]
    %v134 = vld [vmem:[#allocation2 + $0x2b8] sm:$0xff]
    %v135 = vld [vmem:[#allocation2 + $0x2c0] sm:$0xff]
    %v136 = vld [vmem:[#allocation2 + $0x2c8] sm:$0xff]
    %v137 = vld [vmem:[#allocation2 + $0x2d0] sm:$0xff]
    %v138 = vld [vmem:[#allocation2 + $0x2d8] sm:$0xff]
    %v139 = vld [vmem:[#allocation2 + $0x2e0] sm:$0xff]
    %v140 = vld [vmem:[#allocation2 + $0x2e8] sm:$0xff]
    %v141 = vld [vmem:[#allocation2 + $0x2f0] sm:$0xff]
    %v142 = vld [vmem:[#allocation2 + $0x2f8] sm:$0xff]
    %v143 = vld [vmem:[#allocation2 + $0x300] sm:$0xff]
    %v144 = vld [vmem:[#allocation2 + $0x308] sm:$0xff]
    %v145 = vld [vmem:[#allocation2 + $0x310] sm:$0xff]
    %v146 = vld [vmem:[#allocation2 + $0x318] sm:$0xff]
    %v147 = vld [vmem:[#allocation2 + $0x320] sm:$0xff]
    %v148 = vld [vmem:[#allocation2 + $0x328] sm:$0xff]
    %v149 = vld [vmem:[#allocation2 + $0x330] sm:$0xff]
    %v150 = vld [vmem:[#allocation2 + $0x338] sm:$0xff]
    %v151 = vld [vmem:[#allocation2 + $0x340] sm:$0xff]
    %v152 = vld [vmem:[#allocation2 + $0x348] sm:$0xff]
    %v153 = vld [vmem:[#allocation2 + $0x350] sm:$0xff]
    %v154 = vld [vmem:[#allocation2 + $0x358] sm:$0xff]
    %v155 = vld [vmem:[#allocation2 + $0x360] sm:$0xff]
    %v156 = vld [vmem:[#allocation2 + $0x368] sm:$0xff]
    %v157 = vld [vmem:[#allocation2 + $0x370] sm:$0xff]
    %v158 = vld [vmem:[#allocation2 + $0x378] sm:$0xff]
    %v159 = vld [vmem:[#allocation2 + $0x380] sm:$0xff]
    %v160 = vld [vmem:[#allocation2 + $0x388] sm:$0xff]
    %v161 = vld [vmem:[#allocation2 + $0x390] sm:$0xff]
    %v162 = vld [vmem:[#allocation2 + $0x398] sm:$0xff]
    %v163 = vld [vmem:[#allocation2 + $0x3a0] sm:$0xff]
    %v164 = vld [vmem:[#allocation2 + $0x3a8] sm:$0xff]
    %v165 = vld [vmem:[#allocation2 + $0x3b0] sm:$0xff]
    %v166 = vld [vmem:[#allocation2 + $0x3b8] sm:$0xff]
    %v167 = vld [vmem:[#allocation2 + $0x3c0] sm:$0xff]
    %v168 = vld [vmem:[#allocation2 + $0x3c8] sm:$0xff]
    %v169 = vld [vmem:[#allocation2 + $0x3d0] sm:$0xff]
    %v170 = vld [vmem:[#allocation2 + $0x3d8] sm:$0xff]
    %v171 = vld [vmem:[#allocation2 + $0x3e0] sm:$0xff]
    %v172 = vld [vmem:[#allocation2 + $0x3e8] sm:$0xff]
    %v173 = vld [vmem:[#allocation2 + $0x3f0] sm:$0xff]
    %v174 = vld [vmem:[#allocation2 + $0x3f8] sm:$0xff]
    %v175 = vld [vmem:[#allocation5] sm:$0xf]
    %v176 = vld [vmem:[#allocation5 + $0x4] sm:$0xf]
    %v177 = vld [vmem:[#allocation5 + $0x8] sm:$0xf]
    %v178 = vld [vmem:[#allocation5 + $0xc] sm:$0xf]
    %v179 = vld [vmem:[#allocation5 + $0x10] sm:$0xf]
    %v180 = vld [vmem:[#allocation5 + $0x14] sm:$0xf]
    %v181 = vld [vmem:[#allocation5 + $0x18] sm:$0xf]
    %v182 = vld [vmem:[#allocation5 + $0x1c] sm:$0xf]
    %v183 = vld [vmem:[#allocation5 + $0x20] sm:$0xf]
    %v184 = vld [vmem:[#allocation5 + $0x24] sm:$0xf]
    %v185 = vld [vmem:[#allocation5 + $0x28] sm:$0xf]
    %v186 = vld [vmem:[#allocation5 + $0x2c] sm:$0xf]
    %v187 = vld [vmem:[#allocation5 + $0x30] sm:$0xf]
    %v188 = vld [vmem:[#allocation5 + $0x34] sm:$0xf]
    %v189 = vld [vmem:[#allocation5 + $0x38] sm:$0xf]
    %v190 = vld [vmem:[#allocation5 + $0x3c] sm:$0xf]
    %v191 = vld [vmem:[#allocation5 + $0x40] sm:$0xf]
    %v192 = vld [vmem:[#allocation5 + $0x44] sm:$0xf]
    %v193 = vld [vmem:[#allocation5 + $0x48] sm:$0xf]
    %v194 = vld [vmem:[#allocation5 + $0x4c] sm:$0xf]
    %v195 = vld [vmem:[#allocation5 + $0x50] sm:$0xf]
    %v196 = vld [vmem:[#allocation5 + $0x54] sm:$0xf]
    %v197 = vld [vmem:[#allocation5 + $0x58] sm:$0xf]
    %v198 = vld [vmem:[#allocation5 + $0x5c] sm:$0xf]
    %v199 = vld [vmem:[#allocation5 + $0x60] sm:$0xf]
    %v200 = vld [vmem:[#allocation5 + $0x64] sm:$0xf]
    %v201 = vld [vmem:[#allocation5 + $0x68] sm:$0xf]
    %v202 = vld [vmem:[#allocation5 + $0x6c] sm:$0xf]
    %v203 = vld [vmem:[#allocation5 + $0x70] sm:$0xf]
    %v204 = vld [vmem:[#allocation5 + $0x74] sm:$0xf]
    %v205 = vld [vmem:[#allocation5 + $0x78] sm:$0xf]
    %v206 = vld [vmem:[#allocation5 + $0x7c] sm:$0xf]
    %v207 = vld [vmem:[#allocation5 + $0x80] sm:$0xf]
    %v208 = vld [vmem:[#allocation5 + $0x84] sm:$0xf]
    %v209 = vld [vmem:[#allocation5 + $0x88] sm:$0xf]
    %v210 = vld [vmem:[#allocation5 + $0x8c] sm:$0xf]
    %v211 = vld [vmem:[#allocation5 + $0x90] sm:$0xf]
    %v212 = vld [vmem:[#allocation5 + $0x94] sm:$0xf]
    %v213 = vld [vmem:[#allocation5 + $0x98] sm:$0xf]
    %v214 = vld [vmem:[#allocation5 + $0x9c] sm:$0xf]
    %v215 = vld [vmem:[#allocation5 + $0xa0] sm:$0xf]
    %v216 = vld [vmem:[#allocation5 + $0xa4] sm:$0xf]
    %v217 = vld [vmem:[#allocation5 + $0xa8] sm:$0xf]
    %v218 = vld [vmem:[#allocation5 + $0xac] sm:$0xf]
    %v219 = vld [vmem:[#allocation5 + $0xb0] sm:$0xf]
    %v220 = vld [vmem:[#allocation5 + $0xb4] sm:$0xf]
    %v221 = vld [vmem:[#allocation5 + $0xb8] sm:$0xf]
    %v222 = vld [vmem:[#allocation5 + $0xbc] sm:$0xf]
    %v223 = vld [vmem:[#allocation5 + $0xc0] sm:$0xf]
    %v224 = vld [vmem:[#allocation5 + $0xc4] sm:$0xf]
    %v225 = vld [vmem:[#allocation5 + $0xc8] sm:$0xf]
    %v226 = vld [vmem:[#allocation5 + $0xcc] sm:$0xf]
    %v227 = vld [vmem:[#allocation5 + $0xd0] sm:$0xf]
    %v228 = vld [vmem:[#allocation5 + $0xd4] sm:$0xf]
    %v229 = vld [vmem:[#allocation5 + $0xd8] sm:$0xf]
    %v230 = vld [vmem:[#allocation5 + $0xdc] sm:$0xf]
    %v231 = vld [vmem:[#allocation5 + $0xe0] sm:$0xf]
    %v232 = vld [vmem:[#allocation5 + $0xe4] sm:$0xf]
    %v233 = vld [vmem:[#allocation5 + $0xe8] sm:$0xf]
    %v234 = vld [vmem:[#allocation5 + $0xec] sm:$0xf]
    %v235 = vld [vmem:[#allocation5 + $0xf0] sm:$0xf]
    %v236 = vld [vmem:[#allocation5 + $0xf4] sm:$0xf]
    %v237 = vld [vmem:[#allocation5 + $0xf8] sm:$0xf]
    %v238 = vld [vmem:[#allocation5 + $0xfc] sm:$0xf]
    %v239 = vld [vmem:[#allocation5 + $0x100] sm:$0xf]
    %v240 = vld [vmem:[#allocation5 + $0x104] sm:$0xf]
    %v241 = vld [vmem:[#allocation5 + $0x108] sm:$0xf]
    %v242 = vld [vmem:[#allocation5 + $0x10c] sm:$0xf]
    %v243 = vld [vmem:[#allocation5 + $0x110] sm:$0xf]
    %v244 = vld [vmem:[#allocation5 + $0x114] sm:$0xf]
    %v245 = vld [vmem:[#allocation5 + $0x118] sm:$0xf]
    %v246 = vld [vmem:[#allocation5 + $0x11c] sm:$0xf]
    %v247 = vld [vmem:[#allocation5 + $0x120] sm:$0xf]
    %v248 = vld [vmem:[#allocation5 + $0x124] sm:$0xf]
    %v249 = vld [vmem:[#allocation5 + $0x128] sm:$0xf]
    %v250 = vld [vmem:[#allocation5 + $0x12c] sm:$0xf]
    %v251 = vld [vmem:[#allocation5 + $0x130] sm:$0xf]
    %v252 = vld [vmem:[#allocation5 + $0x134] sm:$0xf]
    %v253 = vld [vmem:[#allocation5 + $0x138] sm:$0xf]
    %v254 = vld [vmem:[#allocation5 + $0x13c] sm:$0xf]
    %v255 = vld [vmem:[#allocation5 + $0x140] sm:$0xf]
    %v256 = vld [vmem:[#allocation5 + $0x144] sm:$0xf]
    %v257 = vld [vmem:[#allocation5 + $0x148] sm:$0xf]
    %v258 = vld [vmem:[#allocation5 + $0x14c] sm:$0xf]
    %v259 = vld [vmem:[#allocation5 + $0x150] sm:$0xf]
    %v260 = vld [vmem:[#allocation5 + $0x154] sm:$0xf]
    %v261 = vld [vmem:[#allocation5 + $0x158] sm:$0xf]
    %v262 = vld [vmem:[#allocation5 + $0x15c] sm:$0xf]
    %v263 = vld [vmem:[#allocation5 + $0x160] sm:$0xf]
    %v264 = vld [vmem:[#allocation5 + $0x164] sm:$0xf]
    %v265 = vld [vmem:[#allocation5 + $0x168] sm:$0xf]
    %v266 = vld [vmem:[#allocation5 + $0x16c] sm:$0xf]
    %v267 = vld [vmem:[#allocation5 + $0x170] sm:$0xf]
    %v268 = vld [vmem:[#allocation5 + $0x174] sm:$0xf]
    %v269 = vld [vmem:[#allocation5 + $0x178] sm:$0xf]
    %v270 = vld [vmem:[#allocation5 + $0x17c] sm:$0xf]
    %v271 = vld [vmem:[#allocation5 + $0x180] sm:$0xf]
    %v272 = vld [vmem:[#allocation5 + $0x184] sm:$0xf]
    %v273 = vld [vmem:[#allocation5 + $0x188] sm:$0xf]
    %v274 = vld [vmem:[#allocation5 + $0x18c] sm:$0xf]
    %v275 = vld [vmem:[#allocation5 + $0x190] sm:$0xf]
    %v276 = vld [vmem:[#allocation5 + $0x194] sm:$0xf]
    %v277 = vld [vmem:[#allocation5 + $0x198] sm:$0xf]
    %v278 = vld [vmem:[#allocation5 + $0x19c] sm:$0xf]
    %v279 = vld [vmem:[#allocation5 + $0x1a0] sm:$0xf]
    %v280 = vld [vmem:[#allocation5 + $0x1a4] sm:$0xf]
    %v281 = vld [vmem:[#allocation5 + $0x1a8] sm:$0xf]
    %v282 = vld [vmem:[#allocation5 + $0x1ac] sm:$0xf]
    %v283 = vld [vmem:[#allocation5 + $0x1b0] sm:$0xf]
    %v284 = vld [vmem:[#allocation5 + $0x1b4] sm:$0xf]
    %v285 = vld [vmem:[#allocation5 + $0x1b8] sm:$0xf]
    %v286 = vld [vmem:[#allocation5 + $0x1bc] sm:$0xf]
    %v287 = vld [vmem:[#allocation5 + $0x1c0] sm:$0xf]
    %v288 = vld [vmem:[#allocation5 + $0x1c4] sm:$0xf]
    %v289 = vld [vmem:[#allocation5 + $0x1c8] sm:$0xf]
    %v290 = vld [vmem:[#allocation5 + $0x1cc] sm:$0xf]
    %v291 = vld [vmem:[#allocation5 + $0x1d0] sm:$0xf]
    %v292 = vld [vmem:[#allocation5 + $0x1d4] sm:$0xf]
    %v293 = vld [vmem:[#allocation5 + $0x1d8] sm:$0xf]
    %v294 = vld [vmem:[#allocation5 + $0x1dc] sm:$0xf]
    %v295 = vld [vmem:[#allocation5 + $0x1e0] sm:$0xf]
    %v296 = vld [vmem:[#allocation5 + $0x1e4] sm:$0xf]
    %v297 = vld [vmem:[#allocation5 + $0x1e8] sm:$0xf]
    %v298 = vld [vmem:[#allocation5 + $0x1ec] sm:$0xf]
    %v299 = vld [vmem:[#allocation5 + $0x1f0] sm:$0xf]
    %v300 = vld [vmem:[#allocation5 + $0x1f4] sm:$0xf]
    %v301 = vld [vmem:[#allocation5 + $0x1f8] sm:$0xf]
    %v302 = vld [vmem:[#allocation5 + $0x1fc] sm:$0xf]
    %v303 = vld [vmem:[%s2] sm:$0x1]
    %v305 = vperm.slane %v303, 0
    %v435 = vunpack.c.l.b16 %v47
    %v436 = vunpack.c.h.b16 %v47
    %v437 = vunpack.c.l.b16 %v48
    %v438 = vunpack.c.h.b16 %v48
    %v439 = vunpack.c.l.b16 %v49
    %v440 = vunpack.c.h.b16 %v49
    %v441 = vunpack.c.l.b16 %v50
    %v442 = vunpack.c.h.b16 %v50
    %v443 = vunpack.c.l.b16 %v51
    %v444 = vunpack.c.h.b16 %v51
    %v445 = vunpack.c.l.b16 %v52
    %v446 = vunpack.c.h.b16 %v52
    %v447 = vunpack.c.l.b16 %v53
    %v448 = vunpack.c.h.b16 %v53
    %v449 = vunpack.c.l.b16 %v54
    %v450 = vunpack.c.h.b16 %v54
    %v451 = vunpack.c.l.b16 %v55
    %v452 = vunpack.c.h.b16 %v55
    %v453 = vunpack.c.l.b16 %v56
    %v454 = vunpack.c.h.b16 %v56
    %v455 = vunpack.c.l.b16 %v57
    %v456 = vunpack.c.h.b16 %v57
    %v457 = vunpack.c.l.b16 %v58
    %v458 = vunpack.c.h.b16 %v58
    %v459 = vunpack.c.l.b16 %v59
    %v460 = vunpack.c.h.b16 %v59
    %v461 = vunpack.c.l.b16 %v60
    %v462 = vunpack.c.h.b16 %v60
    %v463 = vunpack.c.l.b16 %v61
    %v464 = vunpack.c.h.b16 %v61
    %v465 = vunpack.c.l.b16 %v62
    %v466 = vunpack.c.h.b16 %v62
    %v467 = vunpack.c.l.b16 %v63
    %v468 = vunpack.c.h.b16 %v63
    %v469 = vunpack.c.l.b16 %v64
    %v470 = vunpack.c.h.b16 %v64
    %v471 = vunpack.c.l.b16 %v65
    %v472 = vunpack.c.h.b16 %v65
    %v473 = vunpack.c.l.b16 %v66
    %v474 = vunpack.c.h.b16 %v66
    %v475 = vunpack.c.l.b16 %v67
    %v476 = vunpack.c.h.b16 %v67
    %v477 = vunpack.c.l.b16 %v68
    %v478 = vunpack.c.h.b16 %v68
    %v479 = vunpack.c.l.b16 %v69
    %v480 = vunpack.c.h.b16 %v69
    %v481 = vunpack.c.l.b16 %v70
    %v482 = vunpack.c.h.b16 %v70
    %v483 = vunpack.c.l.b16 %v71
    %v484 = vunpack.c.h.b16 %v71
    %v485 = vunpack.c.l.b16 %v72
    %v486 = vunpack.c.h.b16 %v72
    %v487 = vunpack.c.l.b16 %v73
    %v488 = vunpack.c.h.b16 %v73
    %v489 = vunpack.c.l.b16 %v74
    %v490 = vunpack.c.h.b16 %v74
    %v491 = vunpack.c.l.b16 %v75
    %v492 = vunpack.c.h.b16 %v75
    %v493 = vunpack.c.l.b16 %v76
    %v494 = vunpack.c.h.b16 %v76
    %v495 = vunpack.c.l.b16 %v77
    %v496 = vunpack.c.h.b16 %v77
    %v497 = vunpack.c.l.b16 %v78
    %v498 = vunpack.c.h.b16 %v78
    %v499 = vunpack.c.l.b16 %v79
    %v500 = vunpack.c.h.b16 %v79
    %v501 = vunpack.c.l.b16 %v80
    %v502 = vunpack.c.h.b16 %v80
    %v503 = vunpack.c.l.b16 %v81
    %v504 = vunpack.c.h.b16 %v81
    %v505 = vunpack.c.l.b16 %v82
    %v506 = vunpack.c.h.b16 %v82
    %v507 = vunpack.c.l.b16 %v83
    %v508 = vunpack.c.h.b16 %v83
    %v509 = vunpack.c.l.b16 %v84
    %v510 = vunpack.c.h.b16 %v84
    %v511 = vunpack.c.l.b16 %v85
    %v512 = vunpack.c.h.b16 %v85
    %v513 = vunpack.c.l.b16 %v86
    %v514 = vunpack.c.h.b16 %v86
    %v515 = vunpack.c.l.b16 %v87
    %v516 = vunpack.c.h.b16 %v87
    %v517 = vunpack.c.l.b16 %v88
    %v518 = vunpack.c.h.b16 %v88
    %v519 = vunpack.c.l.b16 %v89
    %v520 = vunpack.c.h.b16 %v89
    %v521 = vunpack.c.l.b16 %v90
    %v522 = vunpack.c.h.b16 %v90
    %v523 = vunpack.c.l.b16 %v91
    %v524 = vunpack.c.h.b16 %v91
    %v525 = vunpack.c.l.b16 %v92
    %v526 = vunpack.c.h.b16 %v92
    %v527 = vunpack.c.l.b16 %v93
    %v528 = vunpack.c.h.b16 %v93
    %v529 = vunpack.c.l.b16 %v94
    %v530 = vunpack.c.h.b16 %v94
    %v531 = vunpack.c.l.b16 %v95
    %v532 = vunpack.c.h.b16 %v95
    %v533 = vunpack.c.l.b16 %v96
    %v534 = vunpack.c.h.b16 %v96
    %v535 = vunpack.c.l.b16 %v97
    %v536 = vunpack.c.h.b16 %v97
    %v537 = vunpack.c.l.b16 %v98
    %v538 = vunpack.c.h.b16 %v98
    %v539 = vunpack.c.l.b16 %v99
    %v540 = vunpack.c.h.b16 %v99
    %v541 = vunpack.c.l.b16 %v100
    %v542 = vunpack.c.h.b16 %v100
    %v543 = vunpack.c.l.b16 %v101
    %v544 = vunpack.c.h.b16 %v101
    %v545 = vunpack.c.l.b16 %v102
    %v546 = vunpack.c.h.b16 %v102
    %v547 = vunpack.c.l.b16 %v103
    %v548 = vunpack.c.h.b16 %v103
    %v549 = vunpack.c.l.b16 %v104
    %v550 = vunpack.c.h.b16 %v104
    %v551 = vunpack.c.l.b16 %v105
    %v552 = vunpack.c.h.b16 %v105
    %v553 = vunpack.c.l.b16 %v106
    %v554 = vunpack.c.h.b16 %v106
    %v555 = vunpack.c.l.b16 %v107
    %v556 = vunpack.c.h.b16 %v107
    %v557 = vunpack.c.l.b16 %v108
    %v558 = vunpack.c.h.b16 %v108
    %v559 = vunpack.c.l.b16 %v109
    %v560 = vunpack.c.h.b16 %v109
    %v561 = vunpack.c.l.b16 %v110
    %v562 = vunpack.c.h.b16 %v110
    %v563 = vunpack.c.l.b16 %v111
    %v564 = vunpack.c.h.b16 %v111
    %v565 = vunpack.c.l.b16 %v112
    %v566 = vunpack.c.h.b16 %v112
    %v567 = vunpack.c.l.b16 %v113
    %v568 = vunpack.c.h.b16 %v113
    %v569 = vunpack.c.l.b16 %v114
    %v570 = vunpack.c.h.b16 %v114
    %v571 = vunpack.c.l.b16 %v115
    %v572 = vunpack.c.h.b16 %v115
    %v573 = vunpack.c.l.b16 %v116
    %v574 = vunpack.c.h.b16 %v116
    %v575 = vunpack.c.l.b16 %v117
    %v576 = vunpack.c.h.b16 %v117
    %v577 = vunpack.c.l.b16 %v118
    %v578 = vunpack.c.h.b16 %v118
    %v579 = vunpack.c.l.b16 %v119
    %v580 = vunpack.c.h.b16 %v119
    %v581 = vunpack.c.l.b16 %v120
    %v582 = vunpack.c.h.b16 %v120
    %v583 = vunpack.c.l.b16 %v121
    %v584 = vunpack.c.h.b16 %v121
    %v585 = vunpack.c.l.b16 %v122
    %v586 = vunpack.c.h.b16 %v122
    %v587 = vunpack.c.l.b16 %v123
    %v588 = vunpack.c.h.b16 %v123
    %v589 = vunpack.c.l.b16 %v124
    %v590 = vunpack.c.h.b16 %v124
    %v591 = vunpack.c.l.b16 %v125
    %v592 = vunpack.c.h.b16 %v125
    %v593 = vunpack.c.l.b16 %v126
    %v594 = vunpack.c.h.b16 %v126
    %v595 = vunpack.c.l.b16 %v127
    %v596 = vunpack.c.h.b16 %v127
    %v597 = vunpack.c.l.b16 %v128
    %v598 = vunpack.c.h.b16 %v128
    %v599 = vunpack.c.l.b16 %v129
    %v600 = vunpack.c.h.b16 %v129
    %v601 = vunpack.c.l.b16 %v130
    %v602 = vunpack.c.h.b16 %v130
    %v603 = vunpack.c.l.b16 %v131
    %v604 = vunpack.c.h.b16 %v131
    %v605 = vunpack.c.l.b16 %v132
    %v606 = vunpack.c.h.b16 %v132
    %v607 = vunpack.c.l.b16 %v133
    %v608 = vunpack.c.h.b16 %v133
    %v609 = vunpack.c.l.b16 %v134
    %v610 = vunpack.c.h.b16 %v134
    %v611 = vunpack.c.l.b16 %v135
    %v612 = vunpack.c.h.b16 %v135
    %v613 = vunpack.c.l.b16 %v136
    %v614 = vunpack.c.h.b16 %v136
    %v615 = vunpack.c.l.b16 %v137
    %v616 = vunpack.c.h.b16 %v137
    %v617 = vunpack.c.l.b16 %v138
    %v618 = vunpack.c.h.b16 %v138
    %v619 = vunpack.c.l.b16 %v139
    %v620 = vunpack.c.h.b16 %v139
    %v621 = vunpack.c.l.b16 %v140
    %v622 = vunpack.c.h.b16 %v140
    %v623 = vunpack.c.l.b16 %v141
    %v624 = vunpack.c.h.b16 %v141
    %v625 = vunpack.c.l.b16 %v142
    %v626 = vunpack.c.h.b16 %v142
    %v627 = vunpack.c.l.b16 %v143
    %v628 = vunpack.c.h.b16 %v143
    %v629 = vunpack.c.l.b16 %v144
    %v630 = vunpack.c.h.b16 %v144
    %v631 = vunpack.c.l.b16 %v145
    %v632 = vunpack.c.h.b16 %v145
    %v633 = vunpack.c.l.b16 %v146
    %v634 = vunpack.c.h.b16 %v146
    %v635 = vunpack.c.l.b16 %v147
    %v636 = vunpack.c.h.b16 %v147
    %v637 = vunpack.c.l.b16 %v148
    %v638 = vunpack.c.h.b16 %v148
    %v639 = vunpack.c.l.b16 %v149
    %v640 = vunpack.c.h.b16 %v149
    %v641 = vunpack.c.l.b16 %v150
    %v642 = vunpack.c.h.b16 %v150
    %v643 = vunpack.c.l.b16 %v151
    %v644 = vunpack.c.h.b16 %v151
    %v645 = vunpack.c.l.b16 %v152
    %v646 = vunpack.c.h.b16 %v152
    %v647 = vunpack.c.l.b16 %v153
    %v648 = vunpack.c.h.b16 %v153
    %v649 = vunpack.c.l.b16 %v154
    %v650 = vunpack.c.h.b16 %v154
    %v651 = vunpack.c.l.b16 %v155
    %v652 = vunpack.c.h.b16 %v155
    %v653 = vunpack.c.l.b16 %v156
    %v654 = vunpack.c.h.b16 %v156
    %v655 = vunpack.c.l.b16 %v157
    %v656 = vunpack.c.h.b16 %v157
    %v657 = vunpack.c.l.b16 %v158
    %v658 = vunpack.c.h.b16 %v158
    %v659 = vunpack.c.l.b16 %v159
    %v660 = vunpack.c.h.b16 %v159
    %v661 = vunpack.c.l.b16 %v160
    %v662 = vunpack.c.h.b16 %v160
    %v663 = vunpack.c.l.b16 %v161
    %v664 = vunpack.c.h.b16 %v161
    %v665 = vunpack.c.l.b16 %v162
    %v666 = vunpack.c.h.b16 %v162
    %v667 = vunpack.c.l.b16 %v163
    %v668 = vunpack.c.h.b16 %v163
    %v669 = vunpack.c.l.b16 %v164
    %v670 = vunpack.c.h.b16 %v164
    %v671 = vunpack.c.l.b16 %v165
    %v672 = vunpack.c.h.b16 %v165
    %v673 = vunpack.c.l.b16 %v166
    %v674 = vunpack.c.h.b16 %v166
    %v675 = vunpack.c.l.b16 %v167
    %v676 = vunpack.c.h.b16 %v167
    %v677 = vunpack.c.l.b16 %v168
    %v678 = vunpack.c.h.b16 %v168
    %v679 = vunpack.c.l.b16 %v169
    %v680 = vunpack.c.h.b16 %v169
    %v681 = vunpack.c.l.b16 %v170
    %v682 = vunpack.c.h.b16 %v170
    %v683 = vunpack.c.l.b16 %v171
    %v684 = vunpack.c.h.b16 %v171
    %v685 = vunpack.c.l.b16 %v172
    %v686 = vunpack.c.h.b16 %v172
    %v687 = vunpack.c.l.b16 %v173
    %v688 = vunpack.c.h.b16 %v173
    %v689 = vunpack.c.l.b16 %v174
    %v690 = vunpack.c.h.b16 %v174
    %v691 = vpack.c.b16 %v443, %v435
    %v692 = vpack.c.b16 %v444, %v436
    %v693 = vpack.c.b16 %v445, %v437
    %v694 = vpack.c.b16 %v446, %v438
    %v695 = vpack.c.b16 %v447, %v439
    %v696 = vpack.c.b16 %v448, %v440
    %v697 = vpack.c.b16 %v449, %v441
    %v698 = vpack.c.b16 %v450, %v442
    %v699 = vpack.c.b16 %v459, %v451
    %v700 = vpack.c.b16 %v460, %v452
    %v701 = vpack.c.b16 %v461, %v453
    %v702 = vpack.c.b16 %v462, %v454
    %v703 = vpack.c.b16 %v463, %v455
    %v704 = vpack.c.b16 %v464, %v456
    %v705 = vpack.c.b16 %v465, %v457
    %v706 = vpack.c.b16 %v466, %v458
    %v707 = vpack.c.b16 %v475, %v467
    %v708 = vpack.c.b16 %v476, %v468
    %v709 = vpack.c.b16 %v477, %v469
    %v710 = vpack.c.b16 %v478, %v470
    %v711 = vpack.c.b16 %v479, %v471
    %v712 = vpack.c.b16 %v480, %v472
    %v713 = vpack.c.b16 %v481, %v473
    %v714 = vpack.c.b16 %v482, %v474
    %v715 = vpack.c.b16 %v491, %v483
    %v716 = vpack.c.b16 %v492, %v484
    %v717 = vpack.c.b16 %v493, %v485
    %v718 = vpack.c.b16 %v494, %v486
    %v719 = vpack.c.b16 %v495, %v487
    %v720 = vpack.c.b16 %v496, %v488
    %v721 = vpack.c.b16 %v497, %v489
    %v722 = vpack.c.b16 %v498, %v490
    %v723 = vpack.c.b16 %v507, %v499
    %v724 = vpack.c.b16 %v508, %v500
    %v725 = vpack.c.b16 %v509, %v501
    %v726 = vpack.c.b16 %v510, %v502
    %v727 = vpack.c.b16 %v511, %v503
    %v728 = vpack.c.b16 %v512, %v504
    %v729 = vpack.c.b16 %v513, %v505
    %v730 = vpack.c.b16 %v514, %v506
    %v731 = vpack.c.b16 %v523, %v515
    %v732 = vpack.c.b16 %v524, %v516
    %v733 = vpack.c.b16 %v525, %v517
    %v734 = vpack.c.b16 %v526, %v518
    %v735 = vpack.c.b16 %v527, %v519
    %v736 = vpack.c.b16 %v528, %v520
    %v737 = vpack.c.b16 %v529, %v521
    %v738 = vpack.c.b16 %v530, %v522
    %v739 = vpack.c.b16 %v539, %v531
    %v740 = vpack.c.b16 %v540, %v532
    %v741 = vpack.c.b16 %v541, %v533
    %v742 = vpack.c.b16 %v542, %v534
    %v743 = vpack.c.b16 %v543, %v535
    %v744 = vpack.c.b16 %v544, %v536
    %v745 = vpack.c.b16 %v545, %v537
    %v746 = vpack.c.b16 %v546, %v538
    %v747 = vpack.c.b16 %v555, %v547
    %v748 = vpack.c.b16 %v556, %v548
    %v749 = vpack.c.b16 %v557, %v549
    %v750 = vpack.c.b16 %v558, %v550
    %v751 = vpack.c.b16 %v559, %v551
    %v752 = vpack.c.b16 %v560, %v552
    %v753 = vpack.c.b16 %v561, %v553
    %v754 = vpack.c.b16 %v562, %v554
    %v755 = vpack.c.b16 %v571, %v563
    %v756 = vpack.c.b16 %v572, %v564
    %v757 = vpack.c.b16 %v573, %v565
    %v758 = vpack.c.b16 %v574, %v566
    %v759 = vpack.c.b16 %v575, %v567
    %v760 = vpack.c.b16 %v576, %v568
    %v761 = vpack.c.b16 %v577, %v569
    %v762 = vpack.c.b16 %v578, %v570
    %v763 = vpack.c.b16 %v587, %v579
    %v764 = vpack.c.b16 %v588, %v580
    %v765 = vpack.c.b16 %v589, %v581
    %v766 = vpack.c.b16 %v590, %v582
    %v767 = vpack.c.b16 %v591, %v583
    %v768 = vpack.c.b16 %v592, %v584
    %v769 = vpack.c.b16 %v593, %v585
    %v770 = vpack.c.b16 %v594, %v586
    %v771 = vpack.c.b16 %v603, %v595
    %v772 = vpack.c.b16 %v604, %v596
    %v773 = vpack.c.b16 %v605, %v597
    %v774 = vpack.c.b16 %v606, %v598
    %v775 = vpack.c.b16 %v607, %v599
    %v776 = vpack.c.b16 %v608, %v600
    %v777 = vpack.c.b16 %v609, %v601
    %v778 = vpack.c.b16 %v610, %v602
    %v779 = vpack.c.b16 %v619, %v611
    %v780 = vpack.c.b16 %v620, %v612
    %v781 = vpack.c.b16 %v621, %v613
    %v782 = vpack.c.b16 %v622, %v614
    %v783 = vpack.c.b16 %v623, %v615
    %v784 = vpack.c.b16 %v624, %v616
    %v785 = vpack.c.b16 %v625, %v617
    %v786 = vpack.c.b16 %v626, %v618
    %v787 = vpack.c.b16 %v635, %v627
    %v788 = vpack.c.b16 %v636, %v628
    %v789 = vpack.c.b16 %v637, %v629
    %v790 = vpack.c.b16 %v638, %v630
    %v791 = vpack.c.b16 %v639, %v631
    %v792 = vpack.c.b16 %v640, %v632
    %v793 = vpack.c.b16 %v641, %v633
    %v794 = vpack.c.b16 %v642, %v634
    %v795 = vpack.c.b16 %v651, %v643
    %v796 = vpack.c.b16 %v652, %v644
    %v797 = vpack.c.b16 %v653, %v645
    %v798 = vpack.c.b16 %v654, %v646
    %v799 = vpack.c.b16 %v655, %v647
    %v800 = vpack.c.b16 %v656, %v648
    %v801 = vpack.c.b16 %v657, %v649
    %v802 = vpack.c.b16 %v658, %v650
    %v803 = vpack.c.b16 %v667, %v659
    %v804 = vpack.c.b16 %v668, %v660
    %v805 = vpack.c.b16 %v669, %v661
    %v806 = vpack.c.b16 %v670, %v662
    %v807 = vpack.c.b16 %v671, %v663
    %v808 = vpack.c.b16 %v672, %v664
    %v809 = vpack.c.b16 %v673, %v665
    %v810 = vpack.c.b16 %v674, %v666
    %v811 = vpack.c.b16 %v683, %v675
    %v812 = vpack.c.b16 %v684, %v676
    %v813 = vpack.c.b16 %v685, %v677
    %v814 = vpack.c.b16 %v686, %v678
    %v815 = vpack.c.b16 %v687, %v679
    %v816 = vpack.c.b16 %v688, %v680
    %v817 = vpack.c.b16 %v689, %v681
    %v818 = vpack.c.b16 %v690, %v682
    %v1075 = vunpack.c.l.b16 %v175
    %v1076 = vunpack.c.l.b16 %v176
    %v1077 = vunpack.c.l.b16 %v177
    %v1078 = vunpack.c.l.b16 %v178
    %v1079 = vunpack.c.l.b16 %v179
    %v1080 = vunpack.c.l.b16 %v180
    %v1081 = vunpack.c.l.b16 %v181
    %v1082 = vunpack.c.l.b16 %v182
    %v1083 = vunpack.c.l.b16 %v183
    %v1084 = vunpack.c.l.b16 %v184
    %v1085 = vunpack.c.l.b16 %v185
    %v1086 = vunpack.c.l.b16 %v186
    %v1087 = vunpack.c.l.b16 %v187
    %v1088 = vunpack.c.l.b16 %v188
    %v1089 = vunpack.c.l.b16 %v189
    %v1090 = vunpack.c.l.b16 %v190
    %v1091 = vunpack.c.l.b16 %v191
    %v1092 = vunpack.c.l.b16 %v192
    %v1093 = vunpack.c.l.b16 %v193
    %v1094 = vunpack.c.l.b16 %v194
    %v1095 = vunpack.c.l.b16 %v195
    %v1096 = vunpack.c.l.b16 %v196
    %v1097 = vunpack.c.l.b16 %v197
    %v1098 = vunpack.c.l.b16 %v198
    %v1099 = vunpack.c.l.b16 %v199
    %v1100 = vunpack.c.l.b16 %v200
    %v1101 = vunpack.c.l.b16 %v201
    %v1102 = vunpack.c.l.b16 %v202
    %v1103 = vunpack.c.l.b16 %v203
    %v1104 = vunpack.c.l.b16 %v204
    %v1105 = vunpack.c.l.b16 %v205
    %v1106 = vunpack.c.l.b16 %v206
    %v1107 = vunpack.c.l.b16 %v207
    %v1108 = vunpack.c.l.b16 %v208
    %v1109 = vunpack.c.l.b16 %v209
    %v1110 = vunpack.c.l.b16 %v210
    %v1111 = vunpack.c.l.b16 %v211
    %v1112 = vunpack.c.l.b16 %v212
    %v1113 = vunpack.c.l.b16 %v213
    %v1114 = vunpack.c.l.b16 %v214
    %v1115 = vunpack.c.l.b16 %v215
    %v1116 = vunpack.c.l.b16 %v216
    %v1117 = vunpack.c.l.b16 %v217
    %v1118 = vunpack.c.l.b16 %v218
    %v1119 = vunpack.c.l.b16 %v219
    %v1120 = vunpack.c.l.b16 %v220
    %v1121 = vunpack.c.l.b16 %v221
    %v1122 = vunpack.c.l.b16 %v222
    %v1123 = vunpack.c.l.b16 %v223
    %v1124 = vunpack.c.l.b16 %v224
    %v1125 = vunpack.c.l.b16 %v225
    %v1126 = vunpack.c.l.b16 %v226
    %v1127 = vunpack.c.l.b16 %v227
    %v1128 = vunpack.c.l.b16 %v228
    %v1129 = vunpack.c.l.b16 %v229
    %v1130 = vunpack.c.l.b16 %v230
    %v1131 = vunpack.c.l.b16 %v231
    %v1132 = vunpack.c.l.b16 %v232
    %v1133 = vunpack.c.l.b16 %v233
    %v1134 = vunpack.c.l.b16 %v234
    %v1135 = vunpack.c.l.b16 %v235
    %v1136 = vunpack.c.l.b16 %v236
    %v1137 = vunpack.c.l.b16 %v237
    %v1138 = vunpack.c.l.b16 %v238
    %v1139 = vunpack.c.l.b16 %v239
    %v1140 = vunpack.c.l.b16 %v240
    %v1141 = vunpack.c.l.b16 %v241
    %v1142 = vunpack.c.l.b16 %v242
    %v1143 = vunpack.c.l.b16 %v243
    %v1144 = vunpack.c.l.b16 %v244
    %v1145 = vunpack.c.l.b16 %v245
    %v1146 = vunpack.c.l.b16 %v246
    %v1147 = vunpack.c.l.b16 %v247
    %v1148 = vunpack.c.l.b16 %v248
    %v1149 = vunpack.c.l.b16 %v249
    %v1150 = vunpack.c.l.b16 %v250
    %v1151 = vunpack.c.l.b16 %v251
    %v1152 = vunpack.c.l.b16 %v252
    %v1153 = vunpack.c.l.b16 %v253
    %v1154 = vunpack.c.l.b16 %v254
    %v1155 = vunpack.c.l.b16 %v255
    %v1156 = vunpack.c.l.b16 %v256
    %v1157 = vunpack.c.l.b16 %v257
    %v1158 = vunpack.c.l.b16 %v258
    %v1159 = vunpack.c.l.b16 %v259
    %v1160 = vunpack.c.l.b16 %v260
    %v1161 = vunpack.c.l.b16 %v261
    %v1162 = vunpack.c.l.b16 %v262
    %v1163 = vunpack.c.l.b16 %v263
    %v1164 = vunpack.c.l.b16 %v264
    %v1165 = vunpack.c.l.b16 %v265
    %v1166 = vunpack.c.l.b16 %v266
    %v1167 = vunpack.c.l.b16 %v267
    %v1168 = vunpack.c.l.b16 %v268
    %v1169 = vunpack.c.l.b16 %v269
    %v1170 = vunpack.c.l.b16 %v270
    %v1171 = vunpack.c.l.b16 %v271
    %v1172 = vunpack.c.l.b16 %v272
    %v1173 = vunpack.c.l.b16 %v273
    %v1174 = vunpack.c.l.b16 %v274
    %v1175 = vunpack.c.l.b16 %v275
    %v1176 = vunpack.c.l.b16 %v276
    %v1177 = vunpack.c.l.b16 %v277
    %v1178 = vunpack.c.l.b16 %v278
    %v1179 = vunpack.c.l.b16 %v279
    %v1180 = vunpack.c.l.b16 %v280
    %v1181 = vunpack.c.l.b16 %v281
    %v1182 = vunpack.c.l.b16 %v282
    %v1183 = vunpack.c.l.b16 %v283
    %v1184 = vunpack.c.l.b16 %v284
    %v1185 = vunpack.c.l.b16 %v285
    %v1186 = vunpack.c.l.b16 %v286
    %v1187 = vunpack.c.l.b16 %v287
    %v1188 = vunpack.c.l.b16 %v288
    %v1189 = vunpack.c.l.b16 %v289
    %v1190 = vunpack.c.l.b16 %v290
    %v1191 = vunpack.c.l.b16 %v291
    %v1192 = vunpack.c.l.b16 %v292
    %v1193 = vunpack.c.l.b16 %v293
    %v1194 = vunpack.c.l.b16 %v294
    %v1195 = vunpack.c.l.b16 %v295
    %v1196 = vunpack.c.l.b16 %v296
    %v1197 = vunpack.c.l.b16 %v297
    %v1198 = vunpack.c.l.b16 %v298
    %v1199 = vunpack.c.l.b16 %v299
    %v1200 = vunpack.c.l.b16 %v300
    %v1201 = vunpack.c.l.b16 %v301
    %v1202 = vunpack.c.l.b16 %v302
    %v1203 = vpack.c.b16 %v1076, %v1075
    %v1204 = vpack.c.b16 %v1078, %v1077
    %v1205 = vpack.c.b16 %v1080, %v1079
    %v1206 = vpack.c.b16 %v1082, %v1081
    %v1207 = vpack.c.b16 %v1084, %v1083
    %v1208 = vpack.c.b16 %v1086, %v1085
    %v1209 = vpack.c.b16 %v1088, %v1087
    %v1210 = vpack.c.b16 %v1090, %v1089
    %v1211 = vpack.c.b16 %v1092, %v1091
    %v1212 = vpack.c.b16 %v1094, %v1093
    %v1213 = vpack.c.b16 %v1096, %v1095
    %v1214 = vpack.c.b16 %v1098, %v1097
    %v1215 = vpack.c.b16 %v1100, %v1099
    %v1216 = vpack.c.b16 %v1102, %v1101
    %v1217 = vpack.c.b16 %v1104, %v1103
    %v1218 = vpack.c.b16 %v1106, %v1105
    %v1219 = vpack.c.b16 %v1108, %v1107
    %v1220 = vpack.c.b16 %v1110, %v1109
    %v1221 = vpack.c.b16 %v1112, %v1111
    %v1222 = vpack.c.b16 %v1114, %v1113
    %v1223 = vpack.c.b16 %v1116, %v1115
    %v1224 = vpack.c.b16 %v1118, %v1117
    %v1225 = vpack.c.b16 %v1120, %v1119
    %v1226 = vpack.c.b16 %v1122, %v1121
    %v1227 = vpack.c.b16 %v1124, %v1123
    %v1228 = vpack.c.b16 %v1126, %v1125
    %v1229 = vpack.c.b16 %v1128, %v1127
    %v1230 = vpack.c.b16 %v1130, %v1129
    %v1231 = vpack.c.b16 %v1132, %v1131
    %v1232 = vpack.c.b16 %v1134, %v1133
    %v1233 = vpack.c.b16 %v1136, %v1135
    %v1234 = vpack.c.b16 %v1138, %v1137
    %v1235 = vpack.c.b16 %v1140, %v1139
    %v1236 = vpack.c.b16 %v1142, %v1141
    %v1237 = vpack.c.b16 %v1144, %v1143
    %v1238 = vpack.c.b16 %v1146, %v1145
    %v1239 = vpack.c.b16 %v1148, %v1147
    %v1240 = vpack.c.b16 %v1150, %v1149
    %v1241 = vpack.c.b16 %v1152, %v1151
    %v1242 = vpack.c.b16 %v1154, %v1153
    %v1243 = vpack.c.b16 %v1156, %v1155
    %v1244 = vpack.c.b16 %v1158, %v1157
    %v1245 = vpack.c.b16 %v1160, %v1159
    %v1246 = vpack.c.b16 %v1162, %v1161
    %v1247 = vpack.c.b16 %v1164, %v1163
    %v1248 = vpack.c.b16 %v1166, %v1165
    %v1249 = vpack.c.b16 %v1168, %v1167
    %v1250 = vpack.c.b16 %v1170, %v1169
    %v1251 = vpack.c.b16 %v1172, %v1171
    %v1252 = vpack.c.b16 %v1174, %v1173
    %v1253 = vpack.c.b16 %v1176, %v1175
    %v1254 = vpack.c.b16 %v1178, %v1177
    %v1255 = vpack.c.b16 %v1180, %v1179
    %v1256 = vpack.c.b16 %v1182, %v1181
    %v1257 = vpack.c.b16 %v1184, %v1183
    %v1258 = vpack.c.b16 %v1186, %v1185
    %v1259 = vpack.c.b16 %v1188, %v1187
    %v1260 = vpack.c.b16 %v1190, %v1189
    %v1261 = vpack.c.b16 %v1192, %v1191
    %v1262 = vpack.c.b16 %v1194, %v1193
    %v1263 = vpack.c.b16 %v1196, %v1195
    %v1264 = vpack.c.b16 %v1198, %v1197
    %v1265 = vpack.c.b16 %v1200, %v1199
    %v1266 = vpack.c.b16 %v1202, %v1201
    %1331 = vmatpush.bf16.msra.mxu0 %v1210
    %1332 = vmatpush.bf16.msra.mxu0 %v1209
    %1333 = vmatpush.bf16.msra.mxu0 %v1208
    %1334 = vmatpush.bf16.msra.mxu0 %v1207
    %1335 = vmatpush.bf16.msra.mxu0 %v1206
    %1336 = vmatpush.bf16.msra.mxu0 %v1205
    %1337 = vmatpush.bf16.msra.mxu0 %v1204
    %1338 = vmatpush.bf16.msra.mxu0 %v1203
    %1339 = vmatmul.bf16.gmra.mxu0 %v691
    %v1340 = vpop.f32.mrf.mxu0
    %v1341 = vadd.f32 %v305, %v1340
    %v1342 = vpop.f32.mrf.mxu0
    %v1343 = vadd.f32 %v305, %v1342
    %1344 = vmatmul.bf16.gmra.mxu0 %v699
    %v1345 = vpop.f32.mrf.mxu0
    %v1346 = vadd.f32 %v305, %v1345
    %v1347 = vpop.f32.mrf.mxu0
    %v1348 = vadd.f32 %v305, %v1347
    %1349 = vmatmul.bf16.gmra.mxu0 %v707
    %v1350 = vpop.f32.mrf.mxu0
    %v1351 = vadd.f32 %v305, %v1350
    %v1352 = vpop.f32.mrf.mxu0
    %v1353 = vadd.f32 %v305, %v1352
    %1354 = vmatmul.bf16.gmra.mxu0 %v715
    %v1355 = vpop.f32.mrf.mxu0
    %v1356 = vadd.f32 %v305, %v1355
    %v1357 = vpop.f32.mrf.mxu0
    %v1358 = vadd.f32 %v305, %v1357
    %1359 = vmatmul.bf16.gmra.mxu0 %v723
    %v1360 = vpop.f32.mrf.mxu0
    %v1361 = vadd.f32 %v305, %v1360
    %v1362 = vpop.f32.mrf.mxu0
    %v1363 = vadd.f32 %v305, %v1362
    %1364 = vmatmul.bf16.gmra.mxu0 %v731
    %v1365 = vpop.f32.mrf.mxu0
    %v1366 = vadd.f32 %v305, %v1365
    %v1367 = vpop.f32.mrf.mxu0
    %v1368 = vadd.f32 %v305, %v1367
    %1369 = vmatmul.bf16.gmra.mxu0 %v739
    %v1370 = vpop.f32.mrf.mxu0
    %v1371 = vadd.f32 %v305, %v1370
    %v1372 = vpop.f32.mrf.mxu0
    %v1373 = vadd.f32 %v305, %v1372
    %1374 = vmatmul.bf16.gmra.mxu0 %v747
    %v1375 = vpop.f32.mrf.mxu0
    %v1376 = vadd.f32 %v305, %v1375
    %v1377 = vpop.f32.mrf.mxu0
    %v1378 = vadd.f32 %v305, %v1377
    %1379 = vmatmul.bf16.gmra.mxu0 %v755
    %v1380 = vpop.f32.mrf.mxu0
    %v1381 = vadd.f32 %v305, %v1380
    %v1382 = vpop.f32.mrf.mxu0
    %v1383 = vadd.f32 %v305, %v1382
    %1384 = vmatmul.bf16.gmra.mxu0 %v763
    %v1385 = vpop.f32.mrf.mxu0
    %v1386 = vadd.f32 %v305, %v1385
    %v1387 = vpop.f32.mrf.mxu0
    %v1388 = vadd.f32 %v305, %v1387
    %1389 = vmatmul.bf16.gmra.mxu0 %v771
    %v1390 = vpop.f32.mrf.mxu0
    %v1391 = vadd.f32 %v305, %v1390
    %v1392 = vpop.f32.mrf.mxu0
    %v1393 = vadd.f32 %v305, %v1392
    %1394 = vmatmul.bf16.gmra.mxu0 %v779
    %v1395 = vpop.f32.mrf.mxu0
    %v1396 = vadd.f32 %v305, %v1395
    %v1397 = vpop.f32.mrf.mxu0
    %v1398 = vadd.f32 %v305, %v1397
    %1399 = vmatmul.bf16.gmra.mxu0 %v787
    %v1400 = vpop.f32.mrf.mxu0
    %v1401 = vadd.f32 %v305, %v1400
    %v1402 = vpop.f32.mrf.mxu0
    %v1403 = vadd.f32 %v305, %v1402
    %1404 = vmatmul.bf16.gmra.mxu0 %v795
    %v1405 = vpop.f32.mrf.mxu0
    %v1406 = vadd.f32 %v305, %v1405
    %v1407 = vpop.f32.mrf.mxu0
    %v1408 = vadd.f32 %v305, %v1407
    %1409 = vmatmul.bf16.gmra.mxu0 %v803
    %v1410 = vpop.f32.mrf.mxu0
    %v1411 = vadd.f32 %v305, %v1410
    %v1412 = vpop.f32.mrf.mxu0
    %v1413 = vadd.f32 %v305, %v1412
    %1414 = vmatmul.bf16.gmra.mxu0 %v811
    %v1415 = vpop.f32.mrf.mxu0
    %v1416 = vadd.f32 %v305, %v1415
    %v1417 = vpop.f32.mrf.mxu0
    %v1418 = vadd.f32 %v305, %v1417
    %1419 = vdwg.mxu0
    %1420 = vmatpush.bf16.msra.mxu0 %v1218
    %1421 = vmatpush.bf16.msra.mxu0 %v1217
    %1422 = vmatpush.bf16.msra.mxu0 %v1216
    %1423 = vmatpush.bf16.msra.mxu0 %v1215
    %1424 = vmatpush.bf16.msra.mxu0 %v1214
    %1425 = vmatpush.bf16.msra.mxu0 %v1213
    %1426 = vmatpush.bf16.msra.mxu0 %v1212
    %1427 = vmatpush.bf16.msra.mxu0 %v1211
    %1428 = vmatmul.bf16.gmra.mxu0 %v692
    %v1429 = vpop.f32.mrf.mxu0
    %v1430 = vadd.f32 %v1341, %v1429
    %v1431 = vpop.f32.mrf.mxu0
    %v1432 = vadd.f32 %v1343, %v1431
    %1433 = vmatmul.bf16.gmra.mxu0 %v700
    %v1434 = vpop.f32.mrf.mxu0
    %v1435 = vadd.f32 %v1346, %v1434
    %v1436 = vpop.f32.mrf.mxu0
    %v1437 = vadd.f32 %v1348, %v1436
    %1438 = vmatmul.bf16.gmra.mxu0 %v708
    %v1439 = vpop.f32.mrf.mxu0
    %v1440 = vadd.f32 %v1351, %v1439
    %v1441 = vpop.f32.mrf.mxu0
    %v1442 = vadd.f32 %v1353, %v1441
    %1443 = vmatmul.bf16.gmra.mxu0 %v716
    %v1444 = vpop.f32.mrf.mxu0
    %v1445 = vadd.f32 %v1356, %v1444
    %v1446 = vpop.f32.mrf.mxu0
    %v1447 = vadd.f32 %v1358, %v1446
    %1448 = vmatmul.bf16.gmra.mxu0 %v724
    %v1449 = vpop.f32.mrf.mxu0
    %v1450 = vadd.f32 %v1361, %v1449
    %v1451 = vpop.f32.mrf.mxu0
    %v1452 = vadd.f32 %v1363, %v1451
    %1453 = vmatmul.bf16.gmra.mxu0 %v732
    %v1454 = vpop.f32.mrf.mxu0
    %v1455 = vadd.f32 %v1366, %v1454
    %v1456 = vpop.f32.mrf.mxu0
    %v1457 = vadd.f32 %v1368, %v1456
    %1458 = vmatmul.bf16.gmra.mxu0 %v740
    %v1459 = vpop.f32.mrf.mxu0
    %v1460 = vadd.f32 %v1371, %v1459
    %v1461 = vpop.f32.mrf.mxu0
    %v1462 = vadd.f32 %v1373, %v1461
    %1463 = vmatmul.bf16.gmra.mxu0 %v748
    %v1464 = vpop.f32.mrf.mxu0
    %v1465 = vadd.f32 %v1376, %v1464
    %v1466 = vpop.f32.mrf.mxu0
    %v1467 = vadd.f32 %v1378, %v1466
    %1468 = vmatmul.bf16.gmra.mxu0 %v756
    %v1469 = vpop.f32.mrf.mxu0
    %v1470 = vadd.f32 %v1381, %v1469
    %v1471 = vpop.f32.mrf.mxu0
    %v1472 = vadd.f32 %v1383, %v1471
    %1473 = vmatmul.bf16.gmra.mxu0 %v764
    %v1474 = vpop.f32.mrf.mxu0
    %v1475 = vadd.f32 %v1386, %v1474
    %v1476 = vpop.f32.mrf.mxu0
    %v1477 = vadd.f32 %v1388, %v1476
    %1478 = vmatmul.bf16.gmra.mxu0 %v772
    %v1479 = vpop.f32.mrf.mxu0
    %v1480 = vadd.f32 %v1391, %v1479
    %v1481 = vpop.f32.mrf.mxu0
    %v1482 = vadd.f32 %v1393, %v1481
    %1483 = vmatmul.bf16.gmra.mxu0 %v780
    %v1484 = vpop.f32.mrf.mxu0
    %v1485 = vadd.f32 %v1396, %v1484
    %v1486 = vpop.f32.mrf.mxu0
    %v1487 = vadd.f32 %v1398, %v1486
    %1488 = vmatmul.bf16.gmra.mxu0 %v788
    %v1489 = vpop.f32.mrf.mxu0
    %v1490 = vadd.f32 %v1401, %v1489
    %v1491 = vpop.f32.mrf.mxu0
    %v1492 = vadd.f32 %v1403, %v1491
    %1493 = vmatmul.bf16.gmra.mxu0 %v796
    %v1494 = vpop.f32.mrf.mxu0
    %v1495 = vadd.f32 %v1406, %v1494
    %v1496 = vpop.f32.mrf.mxu0
    %v1497 = vadd.f32 %v1408, %v1496
    %1498 = vmatmul.bf16.gmra.mxu0 %v804
    %v1499 = vpop.f32.mrf.mxu0
    %v1500 = vadd.f32 %v1411, %v1499
    %v1501 = vpop.f32.mrf.mxu0
    %v1502 = vadd.f32 %v1413, %v1501
    %1503 = vmatmul.bf16.gmra.mxu0 %v812
    %v1504 = vpop.f32.mrf.mxu0
    %v1505 = vadd.f32 %v1416, %v1504
    %v1506 = vpop.f32.mrf.mxu0
    %v1507 = vadd.f32 %v1418, %v1506
    %1508 = vdwg.mxu0
    %1509 = vmatpush.bf16.msra.mxu0 %v1226
    %1510 = vmatpush.bf16.msra.mxu0 %v1225
    %1511 = vmatpush.bf16.msra.mxu0 %v1224
    %1512 = vmatpush.bf16.msra.mxu0 %v1223
    %1513 = vmatpush.bf16.msra.mxu0 %v1222
    %1514 = vmatpush.bf16.msra.mxu0 %v1221
    %1515 = vmatpush.bf16.msra.mxu0 %v1220
    %1516 = vmatpush.bf16.msra.mxu0 %v1219
    %1517 = vmatmul.bf16.gmra.mxu0 %v693
    %v1518 = vpop.f32.mrf.mxu0
    %v1519 = vadd.f32 %v1430, %v1518
    %v1520 = vpop.f32.mrf.mxu0
    %v1521 = vadd.f32 %v1432, %v1520
    %1522 = vmatmul.bf16.gmra.mxu0 %v701
    %v1523 = vpop.f32.mrf.mxu0
    %v1524 = vadd.f32 %v1435, %v1523
    %v1525 = vpop.f32.mrf.mxu0
    %v1526 = vadd.f32 %v1437, %v1525
    %1527 = vmatmul.bf16.gmra.mxu0 %v709
    %v1528 = vpop.f32.mrf.mxu0
    %v1529 = vadd.f32 %v1440, %v1528
    %v1530 = vpop.f32.mrf.mxu0
    %v1531 = vadd.f32 %v1442, %v1530
    %1532 = vmatmul.bf16.gmra.mxu0 %v717
    %v1533 = vpop.f32.mrf.mxu0
    %v1534 = vadd.f32 %v1445, %v1533
    %v1535 = vpop.f32.mrf.mxu0
    %v1536 = vadd.f32 %v1447, %v1535
    %1537 = vmatmul.bf16.gmra.mxu0 %v725
    %v1538 = vpop.f32.mrf.mxu0
    %v1539 = vadd.f32 %v1450, %v1538
    %v1540 = vpop.f32.mrf.mxu0
    %v1541 = vadd.f32 %v1452, %v1540
    %1542 = vmatmul.bf16.gmra.mxu0 %v733
    %v1543 = vpop.f32.mrf.mxu0
    %v1544 = vadd.f32 %v1455, %v1543
    %v1545 = vpop.f32.mrf.mxu0
    %v1546 = vadd.f32 %v1457, %v1545
    %1547 = vmatmul.bf16.gmra.mxu0 %v741
    %v1548 = vpop.f32.mrf.mxu0
    %v1549 = vadd.f32 %v1460, %v1548
    %v1550 = vpop.f32.mrf.mxu0
    %v1551 = vadd.f32 %v1462, %v1550
    %1552 = vmatmul.bf16.gmra.mxu0 %v749
    %v1553 = vpop.f32.mrf.mxu0
    %v1554 = vadd.f32 %v1465, %v1553
    %v1555 = vpop.f32.mrf.mxu0
    %v1556 = vadd.f32 %v1467, %v1555
    %1557 = vmatmul.bf16.gmra.mxu0 %v757
    %v1558 = vpop.f32.mrf.mxu0
    %v1559 = vadd.f32 %v1470, %v1558
    %v1560 = vpop.f32.mrf.mxu0
    %v1561 = vadd.f32 %v1472, %v1560
    %1562 = vmatmul.bf16.gmra.mxu0 %v765
    %v1563 = vpop.f32.mrf.mxu0
    %v1564 = vadd.f32 %v1475, %v1563
    %v1565 = vpop.f32.mrf.mxu0
    %v1566 = vadd.f32 %v1477, %v1565
    %1567 = vmatmul.bf16.gmra.mxu0 %v773
    %v1568 = vpop.f32.mrf.mxu0
    %v1569 = vadd.f32 %v1480, %v1568
    %v1570 = vpop.f32.mrf.mxu0
    %v1571 = vadd.f32 %v1482, %v1570
    %1572 = vmatmul.bf16.gmra.mxu0 %v781
    %v1573 = vpop.f32.mrf.mxu0
    %v1574 = vadd.f32 %v1485, %v1573
    %v1575 = vpop.f32.mrf.mxu0
    %v1576 = vadd.f32 %v1487, %v1575
    %1577 = vmatmul.bf16.gmra.mxu0 %v789
    %v1578 = vpop.f32.mrf.mxu0
    %v1579 = vadd.f32 %v1490, %v1578
    %v1580 = vpop.f32.mrf.mxu0
    %v1581 = vadd.f32 %v1492, %v1580
    %1582 = vmatmul.bf16.gmra.mxu0 %v797
    %v1583 = vpop.f32.mrf.mxu0
    %v1584 = vadd.f32 %v1495, %v1583
    %v1585 = vpop.f32.mrf.mxu0
    %v1586 = vadd.f32 %v1497, %v1585
    %1587 = vmatmul.bf16.gmra.mxu0 %v805
    %v1588 = vpop.f32.mrf.mxu0
    %v1589 = vadd.f32 %v1500, %v1588
    %v1590 = vpop.f32.mrf.mxu0
    %v1591 = vadd.f32 %v1502, %v1590
    %1592 = vmatmul.bf16.gmra.mxu0 %v813
    %v1593 = vpop.f32.mrf.mxu0
    %v1594 = vadd.f32 %v1505, %v1593
    %v1595 = vpop.f32.mrf.mxu0
    %v1596 = vadd.f32 %v1507, %v1595
    %1597 = vdwg.mxu0
    %1598 = vmatpush.bf16.msra.mxu0 %v1234
    %1599 = vmatpush.bf16.msra.mxu0 %v1233
    %1600 = vmatpush.bf16.msra.mxu0 %v1232
    %1601 = vmatpush.bf16.msra.mxu0 %v1231
    %1602 = vmatpush.bf16.msra.mxu0 %v1230
    %1603 = vmatpush.bf16.msra.mxu0 %v1229
    %1604 = vmatpush.bf16.msra.mxu0 %v1228
    %1605 = vmatpush.bf16.msra.mxu0 %v1227
    %1606 = vmatmul.bf16.gmra.mxu0 %v694
    %v1607 = vpop.f32.mrf.mxu0
    %v1608 = vadd.f32 %v1519, %v1607
    %v1609 = vpop.f32.mrf.mxu0
    %v1610 = vadd.f32 %v1521, %v1609
    %1611 = vmatmul.bf16.gmra.mxu0 %v702
    %v1612 = vpop.f32.mrf.mxu0
    %v1613 = vadd.f32 %v1524, %v1612
    %v1614 = vpop.f32.mrf.mxu0
    %v1615 = vadd.f32 %v1526, %v1614
    %1616 = vmatmul.bf16.gmra.mxu0 %v710
    %v1617 = vpop.f32.mrf.mxu0
    %v1618 = vadd.f32 %v1529, %v1617
    %v1619 = vpop.f32.mrf.mxu0
    %v1620 = vadd.f32 %v1531, %v1619
    %1621 = vmatmul.bf16.gmra.mxu0 %v718
    %v1622 = vpop.f32.mrf.mxu0
    %v1623 = vadd.f32 %v1534, %v1622
    %v1624 = vpop.f32.mrf.mxu0
    %v1625 = vadd.f32 %v1536, %v1624
    %1626 = vmatmul.bf16.gmra.mxu0 %v726
    %v1627 = vpop.f32.mrf.mxu0
    %v1628 = vadd.f32 %v1539, %v1627
    %v1629 = vpop.f32.mrf.mxu0
    %v1630 = vadd.f32 %v1541, %v1629
    %1631 = vmatmul.bf16.gmra.mxu0 %v734
    %v1632 = vpop.f32.mrf.mxu0
    %v1633 = vadd.f32 %v1544, %v1632
    %v1634 = vpop.f32.mrf.mxu0
    %v1635 = vadd.f32 %v1546, %v1634
    %1636 = vmatmul.bf16.gmra.mxu0 %v742
    %v1637 = vpop.f32.mrf.mxu0
    %v1638 = vadd.f32 %v1549, %v1637
    %v1639 = vpop.f32.mrf.mxu0
    %v1640 = vadd.f32 %v1551, %v1639
    %1641 = vmatmul.bf16.gmra.mxu0 %v750
    %v1642 = vpop.f32.mrf.mxu0
    %v1643 = vadd.f32 %v1554, %v1642
    %v1644 = vpop.f32.mrf.mxu0
    %v1645 = vadd.f32 %v1556, %v1644
    %1646 = vmatmul.bf16.gmra.mxu0 %v758
    %v1647 = vpop.f32.mrf.mxu0
    %v1648 = vadd.f32 %v1559, %v1647
    %v1649 = vpop.f32.mrf.mxu0
    %v1650 = vadd.f32 %v1561, %v1649
    %1651 = vmatmul.bf16.gmra.mxu0 %v766
    %v1652 = vpop.f32.mrf.mxu0
    %v1653 = vadd.f32 %v1564, %v1652
    %v1654 = vpop.f32.mrf.mxu0
    %v1655 = vadd.f32 %v1566, %v1654
    %1656 = vmatmul.bf16.gmra.mxu0 %v774
    %v1657 = vpop.f32.mrf.mxu0
    %v1658 = vadd.f32 %v1569, %v1657
    %v1659 = vpop.f32.mrf.mxu0
    %v1660 = vadd.f32 %v1571, %v1659
    %1661 = vmatmul.bf16.gmra.mxu0 %v782
    %v1662 = vpop.f32.mrf.mxu0
    %v1663 = vadd.f32 %v1574, %v1662
    %v1664 = vpop.f32.mrf.mxu0
    %v1665 = vadd.f32 %v1576, %v1664
    %1666 = vmatmul.bf16.gmra.mxu0 %v790
    %v1667 = vpop.f32.mrf.mxu0
    %v1668 = vadd.f32 %v1579, %v1667
    %v1669 = vpop.f32.mrf.mxu0
    %v1670 = vadd.f32 %v1581, %v1669
    %1671 = vmatmul.bf16.gmra.mxu0 %v798
    %v1672 = vpop.f32.mrf.mxu0
    %v1673 = vadd.f32 %v1584, %v1672
    %v1674 = vpop.f32.mrf.mxu0
    %v1675 = vadd.f32 %v1586, %v1674
    %1676 = vmatmul.bf16.gmra.mxu0 %v806
    %v1677 = vpop.f32.mrf.mxu0
    %v1678 = vadd.f32 %v1589, %v1677
    %v1679 = vpop.f32.mrf.mxu0
    %v1680 = vadd.f32 %v1591, %v1679
    %1681 = vmatmul.bf16.gmra.mxu0 %v814
    %v1682 = vpop.f32.mrf.mxu0
    %v1683 = vadd.f32 %v1594, %v1682
    %v1684 = vpop.f32.mrf.mxu0
    %v1685 = vadd.f32 %v1596, %v1684
    %1686 = vdwg.mxu0
    %1687 = vmatpush.bf16.msra.mxu0 %v1242
    %1688 = vmatpush.bf16.msra.mxu0 %v1241
    %1689 = vmatpush.bf16.msra.mxu0 %v1240
    %1690 = vmatpush.bf16.msra.mxu0 %v1239
    %1691 = vmatpush.bf16.msra.mxu0 %v1238
    %1692 = vmatpush.bf16.msra.mxu0 %v1237
    %1693 = vmatpush.bf16.msra.mxu0 %v1236
    %1694 = vmatpush.bf16.msra.mxu0 %v1235
    %1695 = vmatmul.bf16.gmra.mxu0 %v695
    %v1696 = vpop.f32.mrf.mxu0
    %v1697 = vadd.f32 %v1608, %v1696
    %v1698 = vpop.f32.mrf.mxu0
    %v1699 = vadd.f32 %v1610, %v1698
    %1700 = vmatmul.bf16.gmra.mxu0 %v703
    %v1701 = vpop.f32.mrf.mxu0
    %v1702 = vadd.f32 %v1613, %v1701
    %v1703 = vpop.f32.mrf.mxu0
    %v1704 = vadd.f32 %v1615, %v1703
    %1705 = vmatmul.bf16.gmra.mxu0 %v711
    %v1706 = vpop.f32.mrf.mxu0
    %v1707 = vadd.f32 %v1618, %v1706
    %v1708 = vpop.f32.mrf.mxu0
    %v1709 = vadd.f32 %v1620, %v1708
    %1710 = vmatmul.bf16.gmra.mxu0 %v719
    %v1711 = vpop.f32.mrf.mxu0
    %v1712 = vadd.f32 %v1623, %v1711
    %v1713 = vpop.f32.mrf.mxu0
    %v1714 = vadd.f32 %v1625, %v1713
    %1715 = vmatmul.bf16.gmra.mxu0 %v727
    %v1716 = vpop.f32.mrf.mxu0
    %v1717 = vadd.f32 %v1628, %v1716
    %v1718 = vpop.f32.mrf.mxu0
    %v1719 = vadd.f32 %v1630, %v1718
    %1720 = vmatmul.bf16.gmra.mxu0 %v735
    %v1721 = vpop.f32.mrf.mxu0
    %v1722 = vadd.f32 %v1633, %v1721
    %v1723 = vpop.f32.mrf.mxu0
    %v1724 = vadd.f32 %v1635, %v1723
    %1725 = vmatmul.bf16.gmra.mxu0 %v743
    %v1726 = vpop.f32.mrf.mxu0
    %v1727 = vadd.f32 %v1638, %v1726
    %v1728 = vpop.f32.mrf.mxu0
    %v1729 = vadd.f32 %v1640, %v1728
    %1730 = vmatmul.bf16.gmra.mxu0 %v751
    %v1731 = vpop.f32.mrf.mxu0
    %v1732 = vadd.f32 %v1643, %v1731
    %v1733 = vpop.f32.mrf.mxu0
    %v1734 = vadd.f32 %v1645, %v1733
    %1735 = vmatmul.bf16.gmra.mxu0 %v759
    %v1736 = vpop.f32.mrf.mxu0
    %v1737 = vadd.f32 %v1648, %v1736
    %v1738 = vpop.f32.mrf.mxu0
    %v1739 = vadd.f32 %v1650, %v1738
    %1740 = vmatmul.bf16.gmra.mxu0 %v767
    %v1741 = vpop.f32.mrf.mxu0
    %v1742 = vadd.f32 %v1653, %v1741
    %v1743 = vpop.f32.mrf.mxu0
    %v1744 = vadd.f32 %v1655, %v1743
    %1745 = vmatmul.bf16.gmra.mxu0 %v775
    %v1746 = vpop.f32.mrf.mxu0
    %v1747 = vadd.f32 %v1658, %v1746
    %v1748 = vpop.f32.mrf.mxu0
    %v1749 = vadd.f32 %v1660, %v1748
    %1750 = vmatmul.bf16.gmra.mxu0 %v783
    %v1751 = vpop.f32.mrf.mxu0
    %v1752 = vadd.f32 %v1663, %v1751
    %v1753 = vpop.f32.mrf.mxu0
    %v1754 = vadd.f32 %v1665, %v1753
    %1755 = vmatmul.bf16.gmra.mxu0 %v791
    %v1756 = vpop.f32.mrf.mxu0
    %v1757 = vadd.f32 %v1668, %v1756
    %v1758 = vpop.f32.mrf.mxu0
    %v1759 = vadd.f32 %v1670, %v1758
    %1760 = vmatmul.bf16.gmra.mxu0 %v799
    %v1761 = vpop.f32.mrf.mxu0
    %v1762 = vadd.f32 %v1673, %v1761
    %v1763 = vpop.f32.mrf.mxu0
    %v1764 = vadd.f32 %v1675, %v1763
    %1765 = vmatmul.bf16.gmra.mxu0 %v807
    %v1766 = vpop.f32.mrf.mxu0
    %v1767 = vadd.f32 %v1678, %v1766
    %v1768 = vpop.f32.mrf.mxu0
    %v1769 = vadd.f32 %v1680, %v1768
    %1770 = vmatmul.bf16.gmra.mxu0 %v815
    %v1771 = vpop.f32.mrf.mxu0
    %v1772 = vadd.f32 %v1683, %v1771
    %v1773 = vpop.f32.mrf.mxu0
    %v1774 = vadd.f32 %v1685, %v1773
    %1775 = vdwg.mxu0
    %1776 = vmatpush.bf16.msra.mxu0 %v1250
    %1777 = vmatpush.bf16.msra.mxu0 %v1249
    %1778 = vmatpush.bf16.msra.mxu0 %v1248
    %1779 = vmatpush.bf16.msra.mxu0 %v1247
    %1780 = vmatpush.bf16.msra.mxu0 %v1246
    %1781 = vmatpush.bf16.msra.mxu0 %v1245
    %1782 = vmatpush.bf16.msra.mxu0 %v1244
    %1783 = vmatpush.bf16.msra.mxu0 %v1243
    %1784 = vmatmul.bf16.gmra.mxu0 %v696
    %v1785 = vpop.f32.mrf.mxu0
    %v1786 = vadd.f32 %v1697, %v1785
    %v1787 = vpop.f32.mrf.mxu0
    %v1788 = vadd.f32 %v1699, %v1787
    %1789 = vmatmul.bf16.gmra.mxu0 %v704
    %v1790 = vpop.f32.mrf.mxu0
    %v1791 = vadd.f32 %v1702, %v1790
    %v1792 = vpop.f32.mrf.mxu0
    %v1793 = vadd.f32 %v1704, %v1792
    %1794 = vmatmul.bf16.gmra.mxu0 %v712
    %v1795 = vpop.f32.mrf.mxu0
    %v1796 = vadd.f32 %v1707, %v1795
    %v1797 = vpop.f32.mrf.mxu0
    %v1798 = vadd.f32 %v1709, %v1797
    %1799 = vmatmul.bf16.gmra.mxu0 %v720
    %v1800 = vpop.f32.mrf.mxu0
    %v1801 = vadd.f32 %v1712, %v1800
    %v1802 = vpop.f32.mrf.mxu0
    %v1803 = vadd.f32 %v1714, %v1802
    %1804 = vmatmul.bf16.gmra.mxu0 %v728
    %v1805 = vpop.f32.mrf.mxu0
    %v1806 = vadd.f32 %v1717, %v1805
    %v1807 = vpop.f32.mrf.mxu0
    %v1808 = vadd.f32 %v1719, %v1807
    %1809 = vmatmul.bf16.gmra.mxu0 %v736
    %v1810 = vpop.f32.mrf.mxu0
    %v1811 = vadd.f32 %v1722, %v1810
    %v1812 = vpop.f32.mrf.mxu0
    %v1813 = vadd.f32 %v1724, %v1812
    %1814 = vmatmul.bf16.gmra.mxu0 %v744
    %v1815 = vpop.f32.mrf.mxu0
    %v1816 = vadd.f32 %v1727, %v1815
    %v1817 = vpop.f32.mrf.mxu0
    %v1818 = vadd.f32 %v1729, %v1817
    %1819 = vmatmul.bf16.gmra.mxu0 %v752
    %v1820 = vpop.f32.mrf.mxu0
    %v1821 = vadd.f32 %v1732, %v1820
    %v1822 = vpop.f32.mrf.mxu0
    %v1823 = vadd.f32 %v1734, %v1822
    %1824 = vmatmul.bf16.gmra.mxu0 %v760
    %v1825 = vpop.f32.mrf.mxu0
    %v1826 = vadd.f32 %v1737, %v1825
    %v1827 = vpop.f32.mrf.mxu0
    %v1828 = vadd.f32 %v1739, %v1827
    %1829 = vmatmul.bf16.gmra.mxu0 %v768
    %v1830 = vpop.f32.mrf.mxu0
    %v1831 = vadd.f32 %v1742, %v1830
    %v1832 = vpop.f32.mrf.mxu0
    %v1833 = vadd.f32 %v1744, %v1832
    %1834 = vmatmul.bf16.gmra.mxu0 %v776
    %v1835 = vpop.f32.mrf.mxu0
    %v1836 = vadd.f32 %v1747, %v1835
    %v1837 = vpop.f32.mrf.mxu0
    %v1838 = vadd.f32 %v1749, %v1837
    %1839 = vmatmul.bf16.gmra.mxu0 %v784
    %v1840 = vpop.f32.mrf.mxu0
    %v1841 = vadd.f32 %v1752, %v1840
    %v1842 = vpop.f32.mrf.mxu0
    %v1843 = vadd.f32 %v1754, %v1842
    %1844 = vmatmul.bf16.gmra.mxu0 %v792
    %v1845 = vpop.f32.mrf.mxu0
    %v1846 = vadd.f32 %v1757, %v1845
    %v1847 = vpop.f32.mrf.mxu0
    %v1848 = vadd.f32 %v1759, %v1847
    %1849 = vmatmul.bf16.gmra.mxu0 %v800
    %v1850 = vpop.f32.mrf.mxu0
    %v1851 = vadd.f32 %v1762, %v1850
    %v1852 = vpop.f32.mrf.mxu0
    %v1853 = vadd.f32 %v1764, %v1852
    %1854 = vmatmul.bf16.gmra.mxu0 %v808
    %v1855 = vpop.f32.mrf.mxu0
    %v1856 = vadd.f32 %v1767, %v1855
    %v1857 = vpop.f32.mrf.mxu0
    %v1858 = vadd.f32 %v1769, %v1857
    %1859 = vmatmul.bf16.gmra.mxu0 %v816
    %v1860 = vpop.f32.mrf.mxu0
    %v1861 = vadd.f32 %v1772, %v1860
    %v1862 = vpop.f32.mrf.mxu0
    %v1863 = vadd.f32 %v1774, %v1862
    %1864 = vdwg.mxu0
    %1865 = vmatpush.bf16.msra.mxu0 %v1258
    %1866 = vmatpush.bf16.msra.mxu0 %v1257
    %1867 = vmatpush.bf16.msra.mxu0 %v1256
    %1868 = vmatpush.bf16.msra.mxu0 %v1255
    %1869 = vmatpush.bf16.msra.mxu0 %v1254
    %1870 = vmatpush.bf16.msra.mxu0 %v1253
    %1871 = vmatpush.bf16.msra.mxu0 %v1252
    %1872 = vmatpush.bf16.msra.mxu0 %v1251
    %1873 = vmatmul.bf16.gmra.mxu0 %v697
    %v1874 = vpop.f32.mrf.mxu0
    %v1875 = vadd.f32 %v1786, %v1874
    %v1876 = vpop.f32.mrf.mxu0
    %v1877 = vadd.f32 %v1788, %v1876
    %1878 = vmatmul.bf16.gmra.mxu0 %v705
    %v1879 = vpop.f32.mrf.mxu0
    %v1880 = vadd.f32 %v1791, %v1879
    %v1881 = vpop.f32.mrf.mxu0
    %v1882 = vadd.f32 %v1793, %v1881
    %1883 = vmatmul.bf16.gmra.mxu0 %v713
    %v1884 = vpop.f32.mrf.mxu0
    %v1885 = vadd.f32 %v1796, %v1884
    %v1886 = vpop.f32.mrf.mxu0
    %v1887 = vadd.f32 %v1798, %v1886
    %1888 = vmatmul.bf16.gmra.mxu0 %v721
    %v1889 = vpop.f32.mrf.mxu0
    %v1890 = vadd.f32 %v1801, %v1889
    %v1891 = vpop.f32.mrf.mxu0
    %v1892 = vadd.f32 %v1803, %v1891
    %1893 = vmatmul.bf16.gmra.mxu0 %v729
    %v1894 = vpop.f32.mrf.mxu0
    %v1895 = vadd.f32 %v1806, %v1894
    %v1896 = vpop.f32.mrf.mxu0
    %v1897 = vadd.f32 %v1808, %v1896
    %1898 = vmatmul.bf16.gmra.mxu0 %v737
    %v1899 = vpop.f32.mrf.mxu0
    %v1900 = vadd.f32 %v1811, %v1899
    %v1901 = vpop.f32.mrf.mxu0
    %v1902 = vadd.f32 %v1813, %v1901
    %1903 = vmatmul.bf16.gmra.mxu0 %v745
    %v1904 = vpop.f32.mrf.mxu0
    %v1905 = vadd.f32 %v1816, %v1904
    %v1906 = vpop.f32.mrf.mxu0
    %v1907 = vadd.f32 %v1818, %v1906
    %1908 = vmatmul.bf16.gmra.mxu0 %v753
    %v1909 = vpop.f32.mrf.mxu0
    %v1910 = vadd.f32 %v1821, %v1909
    %v1911 = vpop.f32.mrf.mxu0
    %v1912 = vadd.f32 %v1823, %v1911
    %1913 = vmatmul.bf16.gmra.mxu0 %v761
    %v1914 = vpop.f32.mrf.mxu0
    %v1915 = vadd.f32 %v1826, %v1914
    %v1916 = vpop.f32.mrf.mxu0
    %v1917 = vadd.f32 %v1828, %v1916
    %1918 = vmatmul.bf16.gmra.mxu0 %v769
    %v1919 = vpop.f32.mrf.mxu0
    %v1920 = vadd.f32 %v1831, %v1919
    %v1921 = vpop.f32.mrf.mxu0
    %v1922 = vadd.f32 %v1833, %v1921
    %1923 = vmatmul.bf16.gmra.mxu0 %v777
    %v1924 = vpop.f32.mrf.mxu0
    %v1925 = vadd.f32 %v1836, %v1924
    %v1926 = vpop.f32.mrf.mxu0
    %v1927 = vadd.f32 %v1838, %v1926
    %1928 = vmatmul.bf16.gmra.mxu0 %v785
    %v1929 = vpop.f32.mrf.mxu0
    %v1930 = vadd.f32 %v1841, %v1929
    %v1931 = vpop.f32.mrf.mxu0
    %v1932 = vadd.f32 %v1843, %v1931
    %1933 = vmatmul.bf16.gmra.mxu0 %v793
    %v1934 = vpop.f32.mrf.mxu0
    %v1935 = vadd.f32 %v1846, %v1934
    %v1936 = vpop.f32.mrf.mxu0
    %v1937 = vadd.f32 %v1848, %v1936
    %1938 = vmatmul.bf16.gmra.mxu0 %v801
    %v1939 = vpop.f32.mrf.mxu0
    %v1940 = vadd.f32 %v1851, %v1939
    %v1941 = vpop.f32.mrf.mxu0
    %v1942 = vadd.f32 %v1853, %v1941
    %1943 = vmatmul.bf16.gmra.mxu0 %v809
    %v1944 = vpop.f32.mrf.mxu0
    %v1945 = vadd.f32 %v1856, %v1944
    %v1946 = vpop.f32.mrf.mxu0
    %v1947 = vadd.f32 %v1858, %v1946
    %1948 = vmatmul.bf16.gmra.mxu0 %v817
    %v1949 = vpop.f32.mrf.mxu0
    %v1950 = vadd.f32 %v1861, %v1949
    %v1951 = vpop.f32.mrf.mxu0
    %v1952 = vadd.f32 %v1863, %v1951
    %1953 = vdwg.mxu0
    %1954 = vmatpush.bf16.msra.mxu0 %v1266
    %1955 = vmatpush.bf16.msra.mxu0 %v1265
    %1956 = vmatpush.bf16.msra.mxu0 %v1264
    %1957 = vmatpush.bf16.msra.mxu0 %v1263
    %1958 = vmatpush.bf16.msra.mxu0 %v1262
    %1959 = vmatpush.bf16.msra.mxu0 %v1261
    %1960 = vmatpush.bf16.msra.mxu0 %v1260
    %1961 = vmatpush.bf16.msra.mxu0 %v1259
    %1962 = vmatmul.bf16.gmra.mxu0 %v698
    %v1963 = vpop.f32.mrf.mxu0
    %v1964 = vadd.f32 %v1875, %v1963
    %v1965 = vpop.f32.mrf.mxu0
    %v1966 = vadd.f32 %v1877, %v1965
    %1967 = vmatmul.bf16.gmra.mxu0 %v706
    %v1968 = vpop.f32.mrf.mxu0
    %v1969 = vadd.f32 %v1880, %v1968
    %v1970 = vpop.f32.mrf.mxu0
    %v1971 = vadd.f32 %v1882, %v1970
    %1972 = vmatmul.bf16.gmra.mxu0 %v714
    %v1973 = vpop.f32.mrf.mxu0
    %v1974 = vadd.f32 %v1885, %v1973
    %v1975 = vpop.f32.mrf.mxu0
    %v1976 = vadd.f32 %v1887, %v1975
    %1977 = vmatmul.bf16.gmra.mxu0 %v722
    %v1978 = vpop.f32.mrf.mxu0
    %v1979 = vadd.f32 %v1890, %v1978
    %v1980 = vpop.f32.mrf.mxu0
    %v1981 = vadd.f32 %v1892, %v1980
    %1982 = vmatmul.bf16.gmra.mxu0 %v730
    %v1983 = vpop.f32.mrf.mxu0
    %v1984 = vadd.f32 %v1895, %v1983
    %v1985 = vpop.f32.mrf.mxu0
    %v1986 = vadd.f32 %v1897, %v1985
    %1987 = vmatmul.bf16.gmra.mxu0 %v738
    %v1988 = vpop.f32.mrf.mxu0
    %v1989 = vadd.f32 %v1900, %v1988
    %v1990 = vpop.f32.mrf.mxu0
    %v1991 = vadd.f32 %v1902, %v1990
    %1992 = vmatmul.bf16.gmra.mxu0 %v746
    %v1993 = vpop.f32.mrf.mxu0
    %v1994 = vadd.f32 %v1905, %v1993
    %v1995 = vpop.f32.mrf.mxu0
    %v1996 = vadd.f32 %v1907, %v1995
    %1997 = vmatmul.bf16.gmra.mxu0 %v754
    %v1998 = vpop.f32.mrf.mxu0
    %v1999 = vadd.f32 %v1910, %v1998
    %v2000 = vpop.f32.mrf.mxu0
    %v2001 = vadd.f32 %v1912, %v2000
    %2002 = vmatmul.bf16.gmra.mxu0 %v762
    %v2003 = vpop.f32.mrf.mxu0
    %v2004 = vadd.f32 %v1915, %v2003
    %v2005 = vpop.f32.mrf.mxu0
    %v2006 = vadd.f32 %v1917, %v2005
    %2007 = vmatmul.bf16.gmra.mxu0 %v770
    %v2008 = vpop.f32.mrf.mxu0
    %v2009 = vadd.f32 %v1920, %v2008
    %v2010 = vpop.f32.mrf.mxu0
    %v2011 = vadd.f32 %v1922, %v2010
    %2012 = vmatmul.bf16.gmra.mxu0 %v778
    %v2013 = vpop.f32.mrf.mxu0
    %v2014 = vadd.f32 %v1925, %v2013
    %v2015 = vpop.f32.mrf.mxu0
    %v2016 = vadd.f32 %v1927, %v2015
    %2017 = vmatmul.bf16.gmra.mxu0 %v786
    %v2018 = vpop.f32.mrf.mxu0
    %v2019 = vadd.f32 %v1930, %v2018
    %v2020 = vpop.f32.mrf.mxu0
    %v2021 = vadd.f32 %v1932, %v2020
    %2022 = vmatmul.bf16.gmra.mxu0 %v794
    %v2023 = vpop.f32.mrf.mxu0
    %v2024 = vadd.f32 %v1935, %v2023
    %v2025 = vpop.f32.mrf.mxu0
    %v2026 = vadd.f32 %v1937, %v2025
    %2027 = vmatmul.bf16.gmra.mxu0 %v802
    %v2028 = vpop.f32.mrf.mxu0
    %v2029 = vadd.f32 %v1940, %v2028
    %v2030 = vpop.f32.mrf.mxu0
    %v2031 = vadd.f32 %v1942, %v2030
    %2032 = vmatmul.bf16.gmra.mxu0 %v810
    %v2033 = vpop.f32.mrf.mxu0
    %v2034 = vadd.f32 %v1945, %v2033
    %v2035 = vpop.f32.mrf.mxu0
    %v2036 = vadd.f32 %v1947, %v2035
    %2037 = vmatmul.bf16.gmra.mxu0 %v818
    %v2038 = vpop.f32.mrf.mxu0
    %v2039 = vadd.f32 %v1950, %v2038
    %v2040 = vpop.f32.mrf.mxu0
    %v2041 = vadd.f32 %v1952, %v2040
    %2042 = vdwg.mxu0
    %vm2043 = vcmp.gt.f32.partialorder %v1964, 0.0
    %vm2044 = vcmp.gt.f32.partialorder %v1966, 0.0
    %vm2045 = vcmp.gt.f32.partialorder %v1969, 0.0
    %vm2046 = vcmp.gt.f32.partialorder %v1971, 0.0
    %vm2047 = vcmp.gt.f32.partialorder %v1974, 0.0
    %vm2048 = vcmp.gt.f32.partialorder %v1976, 0.0
    %vm2049 = vcmp.gt.f32.partialorder %v1979, 0.0
    %vm2050 = vcmp.gt.f32.partialorder %v1981, 0.0
    %vm2051 = vcmp.gt.f32.partialorder %v1984, 0.0
    %vm2052 = vcmp.gt.f32.partialorder %v1986, 0.0
    %vm2053 = vcmp.gt.f32.partialorder %v1989, 0.0
    %vm2054 = vcmp.gt.f32.partialorder %v1991, 0.0
    %vm2055 = vcmp.gt.f32.partialorder %v1994, 0.0
    %vm2056 = vcmp.gt.f32.partialorder %v1996, 0.0
    %vm2057 = vcmp.gt.f32.partialorder %v1999, 0.0
    %vm2058 = vcmp.gt.f32.partialorder %v2001, 0.0
    %vm2059 = vcmp.gt.f32.partialorder %v2004, 0.0
    %vm2060 = vcmp.gt.f32.partialorder %v2006, 0.0
    %vm2061 = vcmp.gt.f32.partialorder %v2009, 0.0
    %vm2062 = vcmp.gt.f32.partialorder %v2011, 0.0
    %vm2063 = vcmp.gt.f32.partialorder %v2014, 0.0
    %vm2064 = vcmp.gt.f32.partialorder %v2016, 0.0
    %vm2065 = vcmp.gt.f32.partialorder %v2019, 0.0
    %vm2066 = vcmp.gt.f32.partialorder %v2021, 0.0
    %vm2067 = vcmp.gt.f32.partialorder %v2024, 0.0
    %vm2068 = vcmp.gt.f32.partialorder %v2026, 0.0
    %vm2069 = vcmp.gt.f32.partialorder %v2029, 0.0
    %vm2070 = vcmp.gt.f32.partialorder %v2031, 0.0
    %vm2071 = vcmp.gt.f32.partialorder %v2034, 0.0
    %vm2072 = vcmp.gt.f32.partialorder %v2036, 0.0
    %vm2073 = vcmp.gt.f32.partialorder %v2039, 0.0
    %vm2074 = vcmp.gt.f32.partialorder %v2041, 0.0
    %v2075 = vmul.f32 %v1964, 1.442695
    %v2076 = vpow.pop %v2075
    %v2077 = vmul.f32 %v1966, 1.442695
    %v2078 = vpow.pop %v2077
    %v2079 = vmul.f32 %v1969, 1.442695
    %v2080 = vpow.pop %v2079
    %v2081 = vmul.f32 %v1971, 1.442695
    %v2082 = vpow.pop %v2081
    %v2083 = vmul.f32 %v1974, 1.442695
    %v2084 = vpow.pop %v2083
    %v2085 = vmul.f32 %v1976, 1.442695
    %v2086 = vpow.pop %v2085
    %v2087 = vmul.f32 %v1979, 1.442695
    %v2088 = vpow.pop %v2087
    %v2089 = vmul.f32 %v1981, 1.442695
    %v2090 = vpow.pop %v2089
    %v2091 = vmul.f32 %v1984, 1.442695
    %v2092 = vpow.pop %v2091
    %v2093 = vmul.f32 %v1986, 1.442695
    %v2094 = vpow.pop %v2093
    %v2095 = vmul.f32 %v1989, 1.442695
    %v2096 = vpow.pop %v2095
    %v2097 = vmul.f32 %v1991, 1.442695
    %v2098 = vpow.pop %v2097
    %v2099 = vmul.f32 %v1994, 1.442695
    %v2100 = vpow.pop %v2099
    %v2101 = vmul.f32 %v1996, 1.442695
    %v2102 = vpow.pop %v2101
    %v2103 = vmul.f32 %v1999, 1.442695
    %v2104 = vpow.pop %v2103
    %v2105 = vmul.f32 %v2001, 1.442695
    %v2106 = vpow.pop %v2105
    %v2107 = vmul.f32 %v2004, 1.442695
    %v2108 = vpow.pop %v2107
    %v2109 = vmul.f32 %v2006, 1.442695
    %v2110 = vpow.pop %v2109
    %v2111 = vmul.f32 %v2009, 1.442695
    %v2112 = vpow.pop %v2111
    %v2113 = vmul.f32 %v2011, 1.442695
    %v2114 = vpow.pop %v2113
    %v2115 = vmul.f32 %v2014, 1.442695
    %v2116 = vpow.pop %v2115
    %v2117 = vmul.f32 %v2016, 1.442695
    %v2118 = vpow.pop %v2117
    %v2119 = vmul.f32 %v2019, 1.442695
    %v2120 = vpow.pop %v2119
    %v2121 = vmul.f32 %v2021, 1.442695
    %v2122 = vpow.pop %v2121
    %v2123 = vmul.f32 %v2024, 1.442695
    %v2124 = vpow.pop %v2123
    %v2125 = vmul.f32 %v2026, 1.442695
    %v2126 = vpow.pop %v2125
    %v2127 = vmul.f32 %v2029, 1.442695
    %v2128 = vpow.pop %v2127
    %v2129 = vmul.f32 %v2031, 1.442695
    %v2130 = vpow.pop %v2129
    %v2131 = vmul.f32 %v2034, 1.442695
    %v2132 = vpow.pop %v2131
    %v2133 = vmul.f32 %v2036, 1.442695
    %v2134 = vpow.pop %v2133
    %v2135 = vmul.f32 %v2039, 1.442695
    %v2136 = vpow.pop %v2135
    %v2137 = vmul.f32 %v2041, 1.442695
    %v2138 = vpow.pop %v2137
    %v2139 = vsub.f32 %v2076, 1.0
    %v2140 = vsub.f32 %v2078, 1.0
    %v2141 = vsub.f32 %v2080, 1.0
    %v2142 = vsub.f32 %v2082, 1.0
    %v2143 = vsub.f32 %v2084, 1.0
    %v2144 = vsub.f32 %v2086, 1.0
    %v2145 = vsub.f32 %v2088, 1.0
    %v2146 = vsub.f32 %v2090, 1.0
    %v2147 = vsub.f32 %v2092, 1.0
    %v2148 = vsub.f32 %v2094, 1.0
    %v2149 = vsub.f32 %v2096, 1.0
    %v2150 = vsub.f32 %v2098, 1.0
    %v2151 = vsub.f32 %v2100, 1.0
    %v2152 = vsub.f32 %v2102, 1.0
    %v2153 = vsub.f32 %v2104, 1.0
    %v2154 = vsub.f32 %v2106, 1.0
    %v2155 = vsub.f32 %v2108, 1.0
    %v2156 = vsub.f32 %v2110, 1.0
    %v2157 = vsub.f32 %v2112, 1.0
    %v2158 = vsub.f32 %v2114, 1.0
    %v2159 = vsub.f32 %v2116, 1.0
    %v2160 = vsub.f32 %v2118, 1.0
    %v2161 = vsub.f32 %v2120, 1.0
    %v2162 = vsub.f32 %v2122, 1.0
    %v2163 = vsub.f32 %v2124, 1.0
    %v2164 = vsub.f32 %v2126, 1.0
    %v2165 = vsub.f32 %v2128, 1.0
    %v2166 = vsub.f32 %v2130, 1.0
    %v2167 = vsub.f32 %v2132, 1.0
    %v2168 = vsub.f32 %v2134, 1.0
    %v2169 = vsub.f32 %v2136, 1.0
    %v2170 = vsub.f32 %v2138, 1.0
    %v2171 = vmul.f32 %v2139, 1.6732632
    %v2172 = vmul.f32 %v2140, 1.6732632
    %v2173 = vmul.f32 %v2141, 1.6732632
    %v2174 = vmul.f32 %v2142, 1.6732632
    %v2175 = vmul.f32 %v2143, 1.6732632
    %v2176 = vmul.f32 %v2144, 1.6732632
    %v2177 = vmul.f32 %v2145, 1.6732632
    %v2178 = vmul.f32 %v2146, 1.6732632
    %v2179 = vmul.f32 %v2147, 1.6732632
    %v2180 = vmul.f32 %v2148, 1.6732632
    %v2181 = vmul.f32 %v2149, 1.6732632
    %v2182 = vmul.f32 %v2150, 1.6732632
    %v2183 = vmul.f32 %v2151, 1.6732632
    %v2184 = vmul.f32 %v2152, 1.6732632
    %v2185 = vmul.f32 %v2153, 1.6732632
    %v2186 = vmul.f32 %v2154, 1.6732632
    %v2187 = vmul.f32 %v2155, 1.6732632
    %v2188 = vmul.f32 %v2156, 1.6732632
    %v2189 = vmul.f32 %v2157, 1.6732632
    %v2190 = vmul.f32 %v2158, 1.6732632
    %v2191 = vmul.f32 %v2159, 1.6732632
    %v2192 = vmul.f32 %v2160, 1.6732632
    %v2193 = vmul.f32 %v2161, 1.6732632
    %v2194 = vmul.f32 %v2162, 1.6732632
    %v2195 = vmul.f32 %v2163, 1.6732632
    %v2196 = vmul.f32 %v2164, 1.6732632
    %v2197 = vmul.f32 %v2165, 1.6732632
    %v2198 = vmul.f32 %v2166, 1.6732632
    %v2199 = vmul.f32 %v2167, 1.6732632
    %v2200 = vmul.f32 %v2168, 1.6732632
    %v2201 = vmul.f32 %v2169, 1.6732632
    %v2202 = vmul.f32 %v2170, 1.6732632
    %v2203 = vsel %vm2043, %v1964, %v2171
    %v2204 = vsel %vm2044, %v1966, %v2172
    %v2205 = vsel %vm2045, %v1969, %v2173
    %v2206 = vsel %vm2046, %v1971, %v2174
    %v2207 = vsel %vm2047, %v1974, %v2175
    %v2208 = vsel %vm2048, %v1976, %v2176
    %v2209 = vsel %vm2049, %v1979, %v2177
    %v2210 = vsel %vm2050, %v1981, %v2178
    %v2211 = vsel %vm2051, %v1984, %v2179
    %v2212 = vsel %vm2052, %v1986, %v2180
    %v2213 = vsel %vm2053, %v1989, %v2181
    %v2214 = vsel %vm2054, %v1991, %v2182
    %v2215 = vsel %vm2055, %v1994, %v2183
    %v2216 = vsel %vm2056, %v1996, %v2184
    %v2217 = vsel %vm2057, %v1999, %v2185
    %v2218 = vsel %vm2058, %v2001, %v2186
    %v2219 = vsel %vm2059, %v2004, %v2187
    %v2220 = vsel %vm2060, %v2006, %v2188
    %v2221 = vsel %vm2061, %v2009, %v2189
    %v2222 = vsel %vm2062, %v2011, %v2190
    %v2223 = vsel %vm2063, %v2014, %v2191
    %v2224 = vsel %vm2064, %v2016, %v2192
    %v2225 = vsel %vm2065, %v2019, %v2193
    %v2226 = vsel %vm2066, %v2021, %v2194
    %v2227 = vsel %vm2067, %v2024, %v2195
    %v2228 = vsel %vm2068, %v2026, %v2196
    %v2229 = vsel %vm2069, %v2029, %v2197
    %v2230 = vsel %vm2070, %v2031, %v2198
    %v2231 = vsel %vm2071, %v2034, %v2199
    %v2232 = vsel %vm2072, %v2036, %v2200
    %v2233 = vsel %vm2073, %v2039, %v2201
    %v2234 = vsel %vm2074, %v2041, %v2202
    %v2235 = vmul.f32 %v2203, 1.050701
    %v2236 = vmul.f32 %v2204, 1.050701
    %v2237 = vmul.f32 %v2205, 1.050701
    %v2238 = vmul.f32 %v2206, 1.050701
    %v2239 = vmul.f32 %v2207, 1.050701
    %v2240 = vmul.f32 %v2208, 1.050701
    %v2241 = vmul.f32 %v2209, 1.050701
    %v2242 = vmul.f32 %v2210, 1.050701
    %v2243 = vmul.f32 %v2211, 1.050701
    %v2244 = vmul.f32 %v2212, 1.050701
    %v2245 = vmul.f32 %v2213, 1.050701
    %v2246 = vmul.f32 %v2214, 1.050701
    %v2247 = vmul.f32 %v2215, 1.050701
    %v2248 = vmul.f32 %v2216, 1.050701
    %v2249 = vmul.f32 %v2217, 1.050701
    %v2250 = vmul.f32 %v2218, 1.050701
    %v2251 = vmul.f32 %v2219, 1.050701
    %v2252 = vmul.f32 %v2220, 1.050701
    %v2253 = vmul.f32 %v2221, 1.050701
    %v2254 = vmul.f32 %v2222, 1.050701
    %v2255 = vmul.f32 %v2223, 1.050701
    %v2256 = vmul.f32 %v2224, 1.050701
    %v2257 = vmul.f32 %v2225, 1.050701
    %v2258 = vmul.f32 %v2226, 1.050701
    %v2259 = vmul.f32 %v2227, 1.050701
    %v2260 = vmul.f32 %v2228, 1.050701
    %v2261 = vmul.f32 %v2229, 1.050701
    %v2262 = vmul.f32 %v2230, 1.050701
    %v2263 = vmul.f32 %v2231, 1.050701
    %v2264 = vmul.f32 %v2232, 1.050701
    %v2265 = vmul.f32 %v2233, 1.050701
    %v2266 = vmul.f32 %v2234, 1.050701
    %2267 = vst [vmem:[#allocation7] sm:$0xff] %v2235
    %2268 = vst [vmem:[#allocation7 + $0x8] sm:$0xff] %v2236
    %2269 = vst [vmem:[#allocation7 + $0x10] sm:$0xff] %v2237
    %2270 = vst [vmem:[#allocation7 + $0x18] sm:$0xff] %v2238
    %2271 = vst [vmem:[#allocation7 + $0x20] sm:$0xff] %v2239
    %2272 = vst [vmem:[#allocation7 + $0x28] sm:$0xff] %v2240
    %2273 = vst [vmem:[#allocation7 + $0x30] sm:$0xff] %v2241
    %2274 = vst [vmem:[#allocation7 + $0x38] sm:$0xff] %v2242
    %2275 = vst [vmem:[#allocation7 + $0x40] sm:$0xff] %v2243
    %2276 = vst [vmem:[#allocation7 + $0x48] sm:$0xff] %v2244
    %2277 = vst [vmem:[#allocation7 + $0x50] sm:$0xff] %v2245
    %2278 = vst [vmem:[#allocation7 + $0x58] sm:$0xff] %v2246
    %2279 = vst [vmem:[#allocation7 + $0x60] sm:$0xff] %v2247
    %2280 = vst [vmem:[#allocation7 + $0x68] sm:$0xff] %v2248
    %2281 = vst [vmem:[#allocation7 + $0x70] sm:$0xff] %v2249
    %2282 = vst [vmem:[#allocation7 + $0x78] sm:$0xff] %v2250
    %2283 = vst [vmem:[#allocation7 + $0x80] sm:$0xff] %v2251
    %2284 = vst [vmem:[#allocation7 + $0x88] sm:$0xff] %v2252
    %2285 = vst [vmem:[#allocation7 + $0x90] sm:$0xff] %v2253
    %2286 = vst [vmem:[#allocation7 + $0x98] sm:$0xff] %v2254
    %2287 = vst [vmem:[#allocation7 + $0xa0] sm:$0xff] %v2255
    %2288 = vst [vmem:[#allocation7 + $0xa8] sm:$0xff] %v2256
    %2289 = vst [vmem:[#allocation7 + $0xb0] sm:$0xff] %v2257
    %2290 = vst [vmem:[#allocation7 + $0xb8] sm:$0xff] %v2258
    %2291 = vst [vmem:[#allocation7 + $0xc0] sm:$0xff] %v2259
    %2292 = vst [vmem:[#allocation7 + $0xc8] sm:$0xff] %v2260
    %2293 = vst [vmem:[#allocation7 + $0xd0] sm:$0xff] %v2261
    %2294 = vst [vmem:[#allocation7 + $0xd8] sm:$0xff] %v2262
    %2295 = vst [vmem:[#allocation7 + $0xe0] sm:$0xff] %v2263
    %2296 = vst [vmem:[#allocation7 + $0xe8] sm:$0xff] %v2264
    %2297 = vst [vmem:[#allocation7 + $0xf0] sm:$0xff] %v2265
    %2298 = vst [vmem:[#allocation7 + $0xf8] sm:$0xff] %v2266
    // Predicated region
    $region22: #{tpu_custom_call.1} parent=1 // pred_check
      _
    $region23: #{tpu_custom_call.1} parent=1 // pred_check_branch
      %2300 = sbr.rel (0) target = $region25
    $region24: #{tpu_custom_call.1} parent=1 // pred_region
      %2302 = vsyncadd [#allocation4], 0
      %s2303 = sshll.u32 [#allocation7], 4
      %s2304 = int_to_ptr.vmem [resolvable:$true] %s2303
      %s2305 = sshll.u32 %s3, 4
      %s2306 = int_to_ptr.hbm [resolvable:$true] %s2305
      %2311 = dma.vmem_to_hbm [thread:$0]  %s2304, 4096, %s2306, [#allocation4], 128, 128, 8
    $region25: #{tpu_custom_call.1} parent=1 // pred_fallthru
      _
    // Predicated region
    $region26: #{tpu_custom_call.1} parent=1 // pred_check
      _
    $region27: #{tpu_custom_call.1} parent=1 // pred_check_branch
      %2313 = sbr.rel (0) target = $region29
    $region28: #{tpu_custom_call.1} parent=1 // pred_region
      %2315 = dma.done [#allocation4], 4096
    $region29: #{tpu_custom_call.1} parent=1 // pred_fallthru
      _
    %2316 = vsyncpa [#allocation3], 1
    %2317 = vsyncpa [#allocation6], 1
    %2318 = vsyncpa [#allocation4], 1

</llo_original>
